<compile_context>
chip_gen: v7x
topology: tpu7x:2x2x1
jax: 0.10.0
libtpu: 0.0.40
codegen_flags: <defaults>
</compile_context>

<pallas_src>
import functools

import jax
import jax.numpy as jnp
from jax.experimental import pallas as pl
from jax.experimental.pallas import tpu as pltpu

IN_DIM = 2      # LSTM input size
HIDDEN = 17     # LSTM hidden size
FC1_OUT = 8
FC2_OUT = 1

NGATES = 4                  # gate order i, f, g, o (PyTorch)
HPAD = 128                  # per-gate lane padding (one lane tile per gate)
GDIM = NGATES * HPAD        # 512
BPAD = 8                    # batch padded to one full sublane tile

# packed recurrent params (REC_ROWS, GDIM), tile-aligned layout:
#   rows [0, 128)   : W_hh, gate-fused, lane-padded      (aligned slab)
#   row  128        : W_ih row 0
#   row  129        : W_ih row 1
#   row  130        : b_ih + b_hh  (bias folded into the x-projection block)
ROW_WX0 = HPAD + 0
ROW_WX1 = HPAD + 1
ROW_BIAS = HPAD + 2
REC_ROWS = HPAD + 8         # 136 (multiple of 8)

# packed MLP-head params (HEAD_ROWS, 128), big slabs 8-row aligned:
HEAD_LANES = 128
HEAD_W1 = 0                 # rows [0, 128):   fc1 weight (17x8, zero-padded)
HEAD_B1 = HPAD              # row 128:         fc1 bias
HEAD_W2 = HPAD + 8          # rows [136, 264): fc2 weight (8x1, zero-padded)
HEAD_B2 = HPAD + 8 + HPAD   # row 264:         fc2 bias
HEAD_ROWS = HEAD_B2 + 8     # 272 (multiple of 8)


def net_kernel(x_ref, rec_ref, head_ref, out_ref, xp_ref, *, seq_len):
    """Whole network in one invocation; all operands resident in VMEM.

    x_ref    : (T*BPAD, IN_DIM)   time-major, batch padded to 8 rows
    rec_ref  : (REC_ROWS, GDIM)   packed LSTM params (module-level layout)
    head_ref : (HEAD_ROWS, 128)   packed fc1/fc2 params (HEAD_* offsets)
    out_ref  : (BPAD, 128)        lane 0 holds the fc2 output
    xp_ref   : (T*BPAD, GDIM)     VMEM scratch: staged gate pre-activations

    Padded-lane invariant (relied on for correctness): lanes >= HIDDEN of
    every gate block are zero in W_ih/W_hh/bias, so with zero-initialized
    h/c those lanes stay {h=0, c=0} for the whole recurrence, and the
    zero-padded fc1 rows >= HIDDEN never pick them up.
    """
    # ---- input projection on the VPU (K=2: two broadcast multiplies) ------
    # xp[row, :] = x0 * W_ih[0] + x1 * W_ih[1] + (b_ih + b_hh), gate-fused.
    xv = x_ref[...]                                      # (T*BPAD, IN_DIM)
    w_x0 = rec_ref[ROW_WX0:ROW_WX0 + 1, :]               # (1, GDIM)
    w_x1 = rec_ref[ROW_WX1:ROW_WX1 + 1, :]               # (1, GDIM)
    bias = rec_ref[ROW_BIAS:ROW_BIAS + 1, :]             # (1, GDIM)
    xp_ref[...] = xv[:, 0:1] * w_x0 + xv[:, 1:2] * w_x1 + bias

    # ---- LSTM recurrence: fully unrolled, one fused matmul per step -------
    # h / c are single (8,128) vregs; per-step gate slab is a tile-aligned
    # VMEM read; W_hh is re-loaded per step so it never pins 64 vregs.
    h = jnp.zeros((BPAD, HPAD), jnp.float32)
    c = jnp.zeros((BPAD, HPAD), jnp.float32)
    for t in range(seq_len):                             # static unroll (T small)
        w_hh = rec_ref[0:HPAD, :]                        # (128, GDIM), aligned
        g = xp_ref[t * BPAD:(t + 1) * BPAD, :] + jnp.dot(
            h, w_hh, preferred_element_type=jnp.float32)
        i_g = jax.nn.sigmoid(g[:, 0 * HPAD:1 * HPAD])    # lane-tile slices: free
        f_g = jax.nn.sigmoid(g[:, 1 * HPAD:2 * HPAD])
        g_g = jnp.tanh(g[:, 2 * HPAD:3 * HPAD])
        o_g = jax.nn.sigmoid(g[:, 3 * HPAD:4 * HPAD])
        c = f_g * c + i_g * g_g
        h = o_g * jnp.tanh(c)

    # ---- MLP head on the final hidden state (ref-sliced params) -----------
    w1 = head_ref[HEAD_W1:HEAD_W1 + HPAD, :]             # (128, 128), aligned
    b1 = head_ref[HEAD_B1:HEAD_B1 + 1, :]                # (1, 128)
    w2 = head_ref[HEAD_W2:HEAD_W2 + HPAD, :]             # (128, 128), aligned
    b2 = head_ref[HEAD_B2:HEAD_B2 + 1, :]                # (1, 128)
    z = jnp.maximum(jnp.dot(h, w1, preferred_element_type=jnp.float32) + b1, 0.0)
    # full (8,128) tile -> unmasked store; wrapper slices [:B, :1]
    out_ref[...] = jnp.dot(z, w2, preferred_element_type=jnp.float32) + b2


def pack_params(params):
    """One-time host-side packing into two lane-dense, tile-aligned arrays."""
    wih, whh, bih, bhh, w1, b1, w2, b2 = params
    rec = jnp.zeros((REC_ROWS, GDIM), jnp.float32)
    for k in range(NGATES):
        lo = k * HPAD
        # zero-padded rows/cols >= HIDDEN keep the padded-lane invariant.
        rec = rec.at[0:HIDDEN, lo:lo + HIDDEN].set(whh[k])
        rec = rec.at[ROW_WX0, lo:lo + HIDDEN].set(wih[k][0])
        rec = rec.at[ROW_WX1, lo:lo + HIDDEN].set(wih[k][1])
        rec = rec.at[ROW_BIAS, lo:lo + HIDDEN].set(bih[k, 0] + bhh[k, 0])

    head = jnp.zeros((HEAD_ROWS, HEAD_LANES), jnp.float32)
    head = head.at[HEAD_W1:HEAD_W1 + HIDDEN, 0:FC1_OUT].set(w1)
    head = head.at[HEAD_B1, 0:FC1_OUT].set(b1[0])
    head = head.at[HEAD_W2:HEAD_W2 + FC1_OUT, 0:FC2_OUT].set(w2)
    head = head.at[HEAD_B2, 0:FC2_OUT].set(b2[0])
    return rec, head


def net_forward(x_btc, rec_pack, head_pack):
    """x_btc: (B, T, IN_DIM) float32, batch_first like the PyTorch module."""
    B, T, C = x_btc.shape
    assert C == IN_DIM
    assert B <= BPAD, "add a 'parallel' batch grid before scaling B (v7x 2nd TC)"
    # Pad batch to a full sublane tile and go time-major (tiny host-side
    # layout plumbing; makes every in-kernel access tile-aligned).
    x_pad = jnp.zeros((BPAD, T, IN_DIM), jnp.float32).at[:B].set(
        x_btc.astype(jnp.float32))
    x_tm = jnp.transpose(x_pad, (1, 0, 2)).reshape(T * BPAD, IN_DIM)

    kernel = functools.partial(net_kernel, seq_len=T)
    vmem = functools.partial(pl.BlockSpec, memory_space=pltpu.MemorySpace.VMEM)
    out = pl.pallas_call(
        kernel,
        out_shape=jax.ShapeDtypeStruct((BPAD, HEAD_LANES), jnp.float32),
        in_specs=[vmem(), vmem(), vmem()],
        out_specs=vmem(),
        scratch_shapes=[pltpu.VMEM((T * BPAD, GDIM), jnp.float32)],
    )(x_tm, rec_pack, head_pack)
    return out[:B, :FC2_OUT]


def net_reference(x_btc, params):
    """Pure-JAX reference mirroring PyTorch LSTM + fc1 + relu + fc2."""
    wih, whh, bih, bhh, w1, b1, w2, b2 = params
    B, T, _ = x_btc.shape
    h = jnp.zeros((B, HIDDEN), jnp.float32)
    c = jnp.zeros((B, HIDDEN), jnp.float32)
    for t in range(T):
        x_t = x_btc[:, t, :]
        gates = [x_t @ wih[k] + h @ whh[k] + bih[k] + bhh[k] for k in range(4)]
        i_g = jax.nn.sigmoid(gates[0])
        f_g = jax.nn.sigmoid(gates[1])
        g_g = jnp.tanh(gates[2])
        o_g = jax.nn.sigmoid(gates[3])
        c = f_g * c + i_g * g_g
        h = o_g * jnp.tanh(c)
    z = jnp.maximum(h @ w1 + b1, 0.0)
    return z @ w2 + b2


def init_params(key):
    """PyTorch-style uniform(-1/sqrt(H), 1/sqrt(H)) init, deterministic."""
    k = 1.0 / jnp.sqrt(jnp.float32(HIDDEN))
    keys = jax.random.split(key, 8)
    u = lambda kk, shape: jax.random.uniform(kk, shape, jnp.float32, -k, k)
    wih = u(keys[0], (4, IN_DIM, HIDDEN))
    whh = u(keys[1], (4, HIDDEN, HIDDEN))
    bih = u(keys[2], (4, 1, HIDDEN))
    bhh = u(keys[3], (4, 1, HIDDEN))
    w1 = u(keys[4], (HIDDEN, FC1_OUT))
    b1 = u(keys[5], (1, FC1_OUT))
    w2 = u(keys[6], (FC1_OUT, FC2_OUT))
    b2 = u(keys[7], (1, FC2_OUT))
    return (wih, whh, bih, bhh, w1, b1, w2, b2)


if __name__ == "__main__":
    key = jax.random.PRNGKey(0)
    pkey, xkey = jax.random.split(key)
    params = init_params(pkey)
    rec_pack, head_pack = pack_params(params)   # packed once, reused per call

    B, T = 2, 8
    x = jax.random.normal(xkey, (B, T, IN_DIM), jnp.float32)

    fwd = jax.jit(net_forward)
    out = jax.block_until_ready(fwd(x, rec_pack, head_pack))

    ref = net_reference(x, params)
    assert out.shape == (B, FC2_OUT)
    assert jnp.allclose(out, ref, atol=1e-4, rtol=1e-4), (out, ref)

    print("KERNEL_OK")
</pallas_src>

<mosaic_0001>
module attributes {stable_mosaic.version = 11 : i64} {
  func.func @net_kernel(%arg0: memref<64x2xf32, #tpu.memory_space<vmem>>, %arg1: memref<136x512xf32, #tpu.memory_space<vmem>>, %arg2: memref<272x128xf32, #tpu.memory_space<vmem>>, %arg3: memref<8x128xf32, #tpu.memory_space<vmem>>, %arg4: memref<64x512xf32, #tpu.memory_space<vmem>>) attributes {dimension_semantics = [], scalar_prefetch = 0 : i64, scratch_operands = 1 : i64, tpu.core_type = #tpu.core_type<tc>} {
    %c0 = arith.constant 0 : index
    %c0_0 = arith.constant 0 : index
    %0 = vector.load %arg0[%c0, %c0_0] : memref<64x2xf32, #tpu.memory_space<vmem>>, vector<64x2xf32>
    %c128 = arith.constant 128 : index
    %c0_1 = arith.constant 0 : index
    %1 = vector.load %arg1[%c128, %c0_1] : memref<136x512xf32, #tpu.memory_space<vmem>>, vector<1x512xf32>
    %c129 = arith.constant 129 : index
    %c0_2 = arith.constant 0 : index
    %2 = vector.load %arg1[%c129, %c0_2] : memref<136x512xf32, #tpu.memory_space<vmem>>, vector<1x512xf32>
    %c130 = arith.constant 130 : index
    %c0_3 = arith.constant 0 : index
    %3 = vector.load %arg1[%c130, %c0_3] : memref<136x512xf32, #tpu.memory_space<vmem>>, vector<1x512xf32>
    %4 = vector.extract_strided_slice %0 {offsets = [0, 0], sizes = [64, 1], strides = [1, 1]} : vector<64x2xf32> to vector<64x1xf32>
    %5 = vector.broadcast %4 : vector<64x1xf32> to vector<64x512xf32>
    %6 = vector.broadcast %1 : vector<1x512xf32> to vector<64x512xf32>
    %7 = arith.mulf %5, %6 : vector<64x512xf32>
    %8 = vector.extract_strided_slice %0 {offsets = [0, 1], sizes = [64, 1], strides = [1, 1]} : vector<64x2xf32> to vector<64x1xf32>
    %9 = vector.broadcast %8 : vector<64x1xf32> to vector<64x512xf32>
    %10 = vector.broadcast %2 : vector<1x512xf32> to vector<64x512xf32>
    %11 = arith.mulf %9, %10 : vector<64x512xf32>
    %12 = arith.addf %7, %11 : vector<64x512xf32>
    %13 = vector.broadcast %3 : vector<1x512xf32> to vector<64x512xf32>
    %14 = arith.addf %12, %13 : vector<64x512xf32>
    %c0_4 = arith.constant 0 : index
    %c0_5 = arith.constant 0 : index
    %15 = vector.load %arg4[%c0_4, %c0_5] : memref<64x512xf32, #tpu.memory_space<vmem>>, vector<64x512xf32>
    tpu.vector_store %arg4[%c0_4, %c0_5], %14 {strides = array<i32>} : memref<64x512xf32, #tpu.memory_space<vmem>>, vector<64x512xf32>,
    %cst = arith.constant 0.000000e+00 : f32
    %16 = vector.broadcast %cst : f32 to vector<8x128xf32>
    %cst_6 = arith.constant 0.000000e+00 : f32
    %17 = vector.broadcast %cst_6 : f32 to vector<8x128xf32>
    %c0_7 = arith.constant 0 : index
    %c0_8 = arith.constant 0 : index
    %18 = vector.load %arg1[%c0_7, %c0_8] : memref<136x512xf32, #tpu.memory_space<vmem>>, vector<128x512xf32>
    %c0_9 = arith.constant 0 : index
    %c0_10 = arith.constant 0 : index
    %19 = vector.load %arg4[%c0_9, %c0_10] : memref<64x512xf32, #tpu.memory_space<vmem>>, vector<8x512xf32>
    %cst_11 = arith.constant dense<0.000000e+00> : vector<8x512xf32>
    %20 = tpu.matmul %16, %18, %cst_11 {dimension_numbers = #tpu.dot_dimension_numbers<[1], [0], [0], [1], [0, 0, 1, 1], [], []>} : vector<8x128xf32>, vector<128x512xf32>, vector<8x512xf32> -> vector<8x512xf32>
    %21 = arith.addf %19, %20 : vector<8x512xf32>
    %22 = vector.extract_strided_slice %21 {offsets = [0, 0], sizes = [8, 128], strides = [1, 1]} : vector<8x512xf32> to vector<8x128xf32>
    %23 = arith.negf %22 : vector<8x128xf32>
    %24 = math.exp %23 : vector<8x128xf32>
    %cst_12 = arith.constant 1.000000e+00 : f32
    %25 = vector.broadcast %cst_12 : f32 to vector<8x128xf32>
    %26 = arith.addf %25, %24 : vector<8x128xf32>
    %27 = arith.divf %25, %26 : vector<8x128xf32>
    %28 = vector.extract_strided_slice %21 {offsets = [0, 128], sizes = [8, 128], strides = [1, 1]} : vector<8x512xf32> to vector<8x128xf32>
    %29 = arith.negf %28 : vector<8x128xf32>
    %30 = math.exp %29 : vector<8x128xf32>
    %cst_13 = arith.constant 1.000000e+00 : f32
    %31 = vector.broadcast %cst_13 : f32 to vector<8x128xf32>
    %32 = arith.addf %31, %30 : vector<8x128xf32>
    %33 = arith.divf %31, %32 : vector<8x128xf32>
    %34 = vector.extract_strided_slice %21 {offsets = [0, 256], sizes = [8, 128], strides = [1, 1]} : vector<8x512xf32> to vector<8x128xf32>
    %35 = math.tanh %34 : vector<8x128xf32>
    %36 = vector.extract_strided_slice %21 {offsets = [0, 384], sizes = [8, 128], strides = [1, 1]} : vector<8x512xf32> to vector<8x128xf32>
    %37 = arith.negf %36 : vector<8x128xf32>
    %38 = math.exp %37 : vector<8x128xf32>
    %cst_14 = arith.constant 1.000000e+00 : f32
    %39 = vector.broadcast %cst_14 : f32 to vector<8x128xf32>
    %40 = arith.addf %39, %38 : vector<8x128xf32>
    %41 = arith.divf %39, %40 : vector<8x128xf32>
    %42 = arith.mulf %33, %17 : vector<8x128xf32>
    %43 = arith.mulf %27, %35 : vector<8x128xf32>
    %44 = arith.addf %42, %43 : vector<8x128xf32>
    %45 = math.tanh %44 : vector<8x128xf32>
    %46 = arith.mulf %41, %45 : vector<8x128xf32>
    %c0_15 = arith.constant 0 : index
    %c0_16 = arith.constant 0 : index
    %47 = vector.load %arg1[%c0_15, %c0_16] : memref<136x512xf32, #tpu.memory_space<vmem>>, vector<128x512xf32>
    %c8 = arith.constant 8 : index
    %c0_17 = arith.constant 0 : index
    %48 = vector.load %arg4[%c8, %c0_17] : memref<64x512xf32, #tpu.memory_space<vmem>>, vector<8x512xf32>
    %cst_18 = arith.constant dense<0.000000e+00> : vector<8x512xf32>
    %49 = tpu.matmul %46, %47, %cst_18 {dimension_numbers = #tpu.dot_dimension_numbers<[1], [0], [0], [1], [0, 0, 1, 1], [], []>} : vector<8x128xf32>, vector<128x512xf32>, vector<8x512xf32> -> vector<8x512xf32>
    %50 = arith.addf %48, %49 : vector<8x512xf32>
    %51 = vector.extract_strided_slice %50 {offsets = [0, 0], sizes = [8, 128], strides = [1, 1]} : vector<8x512xf32> to vector<8x128xf32>
    %52 = arith.negf %51 : vector<8x128xf32>
    %53 = math.exp %52 : vector<8x128xf32>
    %cst_19 = arith.constant 1.000000e+00 : f32
    %54 = vector.broadcast %cst_19 : f32 to vector<8x128xf32>
    %55 = arith.addf %54, %53 : vector<8x128xf32>
    %56 = arith.divf %54, %55 : vector<8x128xf32>
    %57 = vector.extract_strided_slice %50 {offsets = [0, 128], sizes = [8, 128], strides = [1, 1]} : vector<8x512xf32> to vector<8x128xf32>
    %58 = arith.negf %57 : vector<8x128xf32>
    %59 = math.exp %58 : vector<8x128xf32>
    %cst_20 = arith.constant 1.000000e+00 : f32
    %60 = vector.broadcast %cst_20 : f32 to vector<8x128xf32>
    %61 = arith.addf %60, %59 : vector<8x128xf32>
    %62 = arith.divf %60, %61 : vector<8x128xf32>
    %63 = vector.extract_strided_slice %50 {offsets = [0, 256], sizes = [8, 128], strides = [1, 1]} : vector<8x512xf32> to vector<8x128xf32>
    %64 = math.tanh %63 : vector<8x128xf32>
    %65 = vector.extract_strided_slice %50 {offsets = [0, 384], sizes = [8, 128], strides = [1, 1]} : vector<8x512xf32> to vector<8x128xf32>
    %66 = arith.negf %65 : vector<8x128xf32>
    %67 = math.exp %66 : vector<8x128xf32>
    %cst_21 = arith.constant 1.000000e+00 : f32
    %68 = vector.broadcast %cst_21 : f32 to vector<8x128xf32>
    %69 = arith.addf %68, %67 : vector<8x128xf32>
    %70 = arith.divf %68, %69 : vector<8x128xf32>
    %71 = arith.mulf %62, %44 : vector<8x128xf32>
    %72 = arith.mulf %56, %64 : vector<8x128xf32>
    %73 = arith.addf %71, %72 : vector<8x128xf32>
    %74 = math.tanh %73 : vector<8x128xf32>
    %75 = arith.mulf %70, %74 : vector<8x128xf32>
    %c0_22 = arith.constant 0 : index
    %c0_23 = arith.constant 0 : index
    %76 = vector.load %arg1[%c0_22, %c0_23] : memref<136x512xf32, #tpu.memory_space<vmem>>, vector<128x512xf32>
    %c16 = arith.constant 16 : index
    %c0_24 = arith.constant 0 : index
    %77 = vector.load %arg4[%c16, %c0_24] : memref<64x512xf32, #tpu.memory_space<vmem>>, vector<8x512xf32>
    %cst_25 = arith.constant dense<0.000000e+00> : vector<8x512xf32>
    %78 = tpu.matmul %75, %76, %cst_25 {dimension_numbers = #tpu.dot_dimension_numbers<[1], [0], [0], [1], [0, 0, 1, 1], [], []>} : vector<8x128xf32>, vector<128x512xf32>, vector<8x512xf32> -> vector<8x512xf32>
    %79 = arith.addf %77, %78 : vector<8x512xf32>
    %80 = vector.extract_strided_slice %79 {offsets = [0, 0], sizes = [8, 128], strides = [1, 1]} : vector<8x512xf32> to vector<8x128xf32>
    %81 = arith.negf %80 : vector<8x128xf32>
    %82 = math.exp %81 : vector<8x128xf32>
    %cst_26 = arith.constant 1.000000e+00 : f32
    %83 = vector.broadcast %cst_26 : f32 to vector<8x128xf32>
    %84 = arith.addf %83, %82 : vector<8x128xf32>
    %85 = arith.divf %83, %84 : vector<8x128xf32>
    %86 = vector.extract_strided_slice %79 {offsets = [0, 128], sizes = [8, 128], strides = [1, 1]} : vector<8x512xf32> to vector<8x128xf32>
    %87 = arith.negf %86 : vector<8x128xf32>
    %88 = math.exp %87 : vector<8x128xf32>
    %cst_27 = arith.constant 1.000000e+00 : f32
    %89 = vector.broadcast %cst_27 : f32 to vector<8x128xf32>
    %90 = arith.addf %89, %88 : vector<8x128xf32>
    %91 = arith.divf %89, %90 : vector<8x128xf32>
    %92 = vector.extract_strided_slice %79 {offsets = [0, 256], sizes = [8, 128], strides = [1, 1]} : vector<8x512xf32> to vector<8x128xf32>
    %93 = math.tanh %92 : vector<8x128xf32>
    %94 = vector.extract_strided_slice %79 {offsets = [0, 384], sizes = [8, 128], strides = [1, 1]} : vector<8x512xf32> to vector<8x128xf32>
    %95 = arith.negf %94 : vector<8x128xf32>
    %96 = math.exp %95 : vector<8x128xf32>
    %cst_28 = arith.constant 1.000000e+00 : f32
    %97 = vector.broadcast %cst_28 : f32 to vector<8x128xf32>
    %98 = arith.addf %97, %96 : vector<8x128xf32>
    %99 = arith.divf %97, %98 : vector<8x128xf32>
    %100 = arith.mulf %91, %73 : vector<8x128xf32>
    %101 = arith.mulf %85, %93 : vector<8x128xf32>
    %102 = arith.addf %100, %101 : vector<8x128xf32>
    %103 = math.tanh %102 : vector<8x128xf32>
    %104 = arith.mulf %99, %103 : vector<8x128xf32>
    %c0_29 = arith.constant 0 : index
    %c0_30 = arith.constant 0 : index
    %105 = vector.load %arg1[%c0_29, %c0_30] : memref<136x512xf32, #tpu.memory_space<vmem>>, vector<128x512xf32>
    %c24 = arith.constant 24 : index
    %c0_31 = arith.constant 0 : index
    %106 = vector.load %arg4[%c24, %c0_31] : memref<64x512xf32, #tpu.memory_space<vmem>>, vector<8x512xf32>
    %cst_32 = arith.constant dense<0.000000e+00> : vector<8x512xf32>
    %107 = tpu.matmul %104, %105, %cst_32 {dimension_numbers = #tpu.dot_dimension_numbers<[1], [0], [0], [1], [0, 0, 1, 1], [], []>} : vector<8x128xf32>, vector<128x512xf32>, vector<8x512xf32> -> vector<8x512xf32>
    %108 = arith.addf %106, %107 : vector<8x512xf32>
    %109 = vector.extract_strided_slice %108 {offsets = [0, 0], sizes = [8, 128], strides = [1, 1]} : vector<8x512xf32> to vector<8x128xf32>
    %110 = arith.negf %109 : vector<8x128xf32>
    %111 = math.exp %110 : vector<8x128xf32>
    %cst_33 = arith.constant 1.000000e+00 : f32
    %112 = vector.broadcast %cst_33 : f32 to vector<8x128xf32>
    %113 = arith.addf %112, %111 : vector<8x128xf32>
    %114 = arith.divf %112, %113 : vector<8x128xf32>
    %115 = vector.extract_strided_slice %108 {offsets = [0, 128], sizes = [8, 128], strides = [1, 1]} : vector<8x512xf32> to vector<8x128xf32>
    %116 = arith.negf %115 : vector<8x128xf32>
    %117 = math.exp %116 : vector<8x128xf32>
    %cst_34 = arith.constant 1.000000e+00 : f32
    %118 = vector.broadcast %cst_34 : f32 to vector<8x128xf32>
    %119 = arith.addf %118, %117 : vector<8x128xf32>
    %120 = arith.divf %118, %119 : vector<8x128xf32>
    %121 = vector.extract_strided_slice %108 {offsets = [0, 256], sizes = [8, 128], strides = [1, 1]} : vector<8x512xf32> to vector<8x128xf32>
    %122 = math.tanh %121 : vector<8x128xf32>
    %123 = vector.extract_strided_slice %108 {offsets = [0, 384], sizes = [8, 128], strides = [1, 1]} : vector<8x512xf32> to vector<8x128xf32>
    %124 = arith.negf %123 : vector<8x128xf32>
    %125 = math.exp %124 : vector<8x128xf32>
    %cst_35 = arith.constant 1.000000e+00 : f32
    %126 = vector.broadcast %cst_35 : f32 to vector<8x128xf32>
    %127 = arith.addf %126, %125 : vector<8x128xf32>
    %128 = arith.divf %126, %127 : vector<8x128xf32>
    %129 = arith.mulf %120, %102 : vector<8x128xf32>
    %130 = arith.mulf %114, %122 : vector<8x128xf32>
    %131 = arith.addf %129, %130 : vector<8x128xf32>
    %132 = math.tanh %131 : vector<8x128xf32>
    %133 = arith.mulf %128, %132 : vector<8x128xf32>
    %c0_36 = arith.constant 0 : index
    %c0_37 = arith.constant 0 : index
    %134 = vector.load %arg1[%c0_36, %c0_37] : memref<136x512xf32, #tpu.memory_space<vmem>>, vector<128x512xf32>
    %c32 = arith.constant 32 : index
    %c0_38 = arith.constant 0 : index
    %135 = vector.load %arg4[%c32, %c0_38] : memref<64x512xf32, #tpu.memory_space<vmem>>, vector<8x512xf32>
    %cst_39 = arith.constant dense<0.000000e+00> : vector<8x512xf32>
    %136 = tpu.matmul %133, %134, %cst_39 {dimension_numbers = #tpu.dot_dimension_numbers<[1], [0], [0], [1], [0, 0, 1, 1], [], []>} : vector<8x128xf32>, vector<128x512xf32>, vector<8x512xf32> -> vector<8x512xf32>
    %137 = arith.addf %135, %136 : vector<8x512xf32>
    %138 = vector.extract_strided_slice %137 {offsets = [0, 0], sizes = [8, 128], strides = [1, 1]} : vector<8x512xf32> to vector<8x128xf32>
    %139 = arith.negf %138 : vector<8x128xf32>
    %140 = math.exp %139 : vector<8x128xf32>
    %cst_40 = arith.constant 1.000000e+00 : f32
    %141 = vector.broadcast %cst_40 : f32 to vector<8x128xf32>
    %142 = arith.addf %141, %140 : vector<8x128xf32>
    %143 = arith.divf %141, %142 : vector<8x128xf32>
    %144 = vector.extract_strided_slice %137 {offsets = [0, 128], sizes = [8, 128], strides = [1, 1]} : vector<8x512xf32> to vector<8x128xf32>
    %145 = arith.negf %144 : vector<8x128xf32>
    %146 = math.exp %145 : vector<8x128xf32>
    %cst_41 = arith.constant 1.000000e+00 : f32
    %147 = vector.broadcast %cst_41 : f32 to vector<8x128xf32>
    %148 = arith.addf %147, %146 : vector<8x128xf32>
    %149 = arith.divf %147, %148 : vector<8x128xf32>
    %150 = vector.extract_strided_slice %137 {offsets = [0, 256], sizes = [8, 128], strides = [1, 1]} : vector<8x512xf32> to vector<8x128xf32>
    %151 = math.tanh %150 : vector<8x128xf32>
    %152 = vector.extract_strided_slice %137 {offsets = [0, 384], sizes = [8, 128], strides = [1, 1]} : vector<8x512xf32> to vector<8x128xf32>
    %153 = arith.negf %152 : vector<8x128xf32>
    %154 = math.exp %153 : vector<8x128xf32>
    %cst_42 = arith.constant 1.000000e+00 : f32
    %155 = vector.broadcast %cst_42 : f32 to vector<8x128xf32>
    %156 = arith.addf %155, %154 : vector<8x128xf32>
    %157 = arith.divf %155, %156 : vector<8x128xf32>
    %158 = arith.mulf %149, %131 : vector<8x128xf32>
    %159 = arith.mulf %143, %151 : vector<8x128xf32>
    %160 = arith.addf %158, %159 : vector<8x128xf32>
    %161 = math.tanh %160 : vector<8x128xf32>
    %162 = arith.mulf %157, %161 : vector<8x128xf32>
    %c0_43 = arith.constant 0 : index
    %c0_44 = arith.constant 0 : index
    %163 = vector.load %arg1[%c0_43, %c0_44] : memref<136x512xf32, #tpu.memory_space<vmem>>, vector<128x512xf32>
    %c40 = arith.constant 40 : index
    %c0_45 = arith.constant 0 : index
    %164 = vector.load %arg4[%c40, %c0_45] : memref<64x512xf32, #tpu.memory_space<vmem>>, vector<8x512xf32>
    %cst_46 = arith.constant dense<0.000000e+00> : vector<8x512xf32>
    %165 = tpu.matmul %162, %163, %cst_46 {dimension_numbers = #tpu.dot_dimension_numbers<[1], [0], [0], [1], [0, 0, 1, 1], [], []>} : vector<8x128xf32>, vector<128x512xf32>, vector<8x512xf32> -> vector<8x512xf32>
    %166 = arith.addf %164, %165 : vector<8x512xf32>
    %167 = vector.extract_strided_slice %166 {offsets = [0, 0], sizes = [8, 128], strides = [1, 1]} : vector<8x512xf32> to vector<8x128xf32>
    %168 = arith.negf %167 : vector<8x128xf32>
    %169 = math.exp %168 : vector<8x128xf32>
    %cst_47 = arith.constant 1.000000e+00 : f32
    %170 = vector.broadcast %cst_47 : f32 to vector<8x128xf32>
    %171 = arith.addf %170, %169 : vector<8x128xf32>
    %172 = arith.divf %170, %171 : vector<8x128xf32>
    %173 = vector.extract_strided_slice %166 {offsets = [0, 128], sizes = [8, 128], strides = [1, 1]} : vector<8x512xf32> to vector<8x128xf32>
    %174 = arith.negf %173 : vector<8x128xf32>
    %175 = math.exp %174 : vector<8x128xf32>
    %cst_48 = arith.constant 1.000000e+00 : f32
    %176 = vector.broadcast %cst_48 : f32 to vector<8x128xf32>
    %177 = arith.addf %176, %175 : vector<8x128xf32>
    %178 = arith.divf %176, %177 : vector<8x128xf32>
    %179 = vector.extract_strided_slice %166 {offsets = [0, 256], sizes = [8, 128], strides = [1, 1]} : vector<8x512xf32> to vector<8x128xf32>
    %180 = math.tanh %179 : vector<8x128xf32>
    %181 = vector.extract_strided_slice %166 {offsets = [0, 384], sizes = [8, 128], strides = [1, 1]} : vector<8x512xf32> to vector<8x128xf32>
    %182 = arith.negf %181 : vector<8x128xf32>
    %183 = math.exp %182 : vector<8x128xf32>
    %cst_49 = arith.constant 1.000000e+00 : f32
    %184 = vector.broadcast %cst_49 : f32 to vector<8x128xf32>
    %185 = arith.addf %184, %183 : vector<8x128xf32>
    %186 = arith.divf %184, %185 : vector<8x128xf32>
    %187 = arith.mulf %178, %160 : vector<8x128xf32>
    %188 = arith.mulf %172, %180 : vector<8x128xf32>
    %189 = arith.addf %187, %188 : vector<8x128xf32>
    %190 = math.tanh %189 : vector<8x128xf32>
    %191 = arith.mulf %186, %190 : vector<8x128xf32>
    %c0_50 = arith.constant 0 : index
    %c0_51 = arith.constant 0 : index
    %192 = vector.load %arg1[%c0_50, %c0_51] : memref<136x512xf32, #tpu.memory_space<vmem>>, vector<128x512xf32>
    %c48 = arith.constant 48 : index
    %c0_52 = arith.constant 0 : index
    %193 = vector.load %arg4[%c48, %c0_52] : memref<64x512xf32, #tpu.memory_space<vmem>>, vector<8x512xf32>
    %cst_53 = arith.constant dense<0.000000e+00> : vector<8x512xf32>
    %194 = tpu.matmul %191, %192, %cst_53 {dimension_numbers = #tpu.dot_dimension_numbers<[1], [0], [0], [1], [0, 0, 1, 1], [], []>} : vector<8x128xf32>, vector<128x512xf32>, vector<8x512xf32> -> vector<8x512xf32>
    %195 = arith.addf %193, %194 : vector<8x512xf32>
    %196 = vector.extract_strided_slice %195 {offsets = [0, 0], sizes = [8, 128], strides = [1, 1]} : vector<8x512xf32> to vector<8x128xf32>
    %197 = arith.negf %196 : vector<8x128xf32>
    %198 = math.exp %197 : vector<8x128xf32>
    %cst_54 = arith.constant 1.000000e+00 : f32
    %199 = vector.broadcast %cst_54 : f32 to vector<8x128xf32>
    %200 = arith.addf %199, %198 : vector<8x128xf32>
    %201 = arith.divf %199, %200 : vector<8x128xf32>
    %202 = vector.extract_strided_slice %195 {offsets = [0, 128], sizes = [8, 128], strides = [1, 1]} : vector<8x512xf32> to vector<8x128xf32>
    %203 = arith.negf %202 : vector<8x128xf32>
    %204 = math.exp %203 : vector<8x128xf32>
    %cst_55 = arith.constant 1.000000e+00 : f32
    %205 = vector.broadcast %cst_55 : f32 to vector<8x128xf32>
    %206 = arith.addf %205, %204 : vector<8x128xf32>
    %207 = arith.divf %205, %206 : vector<8x128xf32>
    %208 = vector.extract_strided_slice %195 {offsets = [0, 256], sizes = [8, 128], strides = [1, 1]} : vector<8x512xf32> to vector<8x128xf32>
    %209 = math.tanh %208 : vector<8x128xf32>
    %210 = vector.extract_strided_slice %195 {offsets = [0, 384], sizes = [8, 128], strides = [1, 1]} : vector<8x512xf32> to vector<8x128xf32>
    %211 = arith.negf %210 : vector<8x128xf32>
    %212 = math.exp %211 : vector<8x128xf32>
    %cst_56 = arith.constant 1.000000e+00 : f32
    %213 = vector.broadcast %cst_56 : f32 to vector<8x128xf32>
    %214 = arith.addf %213, %212 : vector<8x128xf32>
    %215 = arith.divf %213, %214 : vector<8x128xf32>
    %216 = arith.mulf %207, %189 : vector<8x128xf32>
    %217 = arith.mulf %201, %209 : vector<8x128xf32>
    %218 = arith.addf %216, %217 : vector<8x128xf32>
    %219 = math.tanh %218 : vector<8x128xf32>
    %220 = arith.mulf %215, %219 : vector<8x128xf32>
    %c0_57 = arith.constant 0 : index
    %c0_58 = arith.constant 0 : index
    %221 = vector.load %arg1[%c0_57, %c0_58] : memref<136x512xf32, #tpu.memory_space<vmem>>, vector<128x512xf32>
    %c56 = arith.constant 56 : index
    %c0_59 = arith.constant 0 : index
    %222 = vector.load %arg4[%c56, %c0_59] : memref<64x512xf32, #tpu.memory_space<vmem>>, vector<8x512xf32>
    %cst_60 = arith.constant dense<0.000000e+00> : vector<8x512xf32>
    %223 = tpu.matmul %220, %221, %cst_60 {dimension_numbers = #tpu.dot_dimension_numbers<[1], [0], [0], [1], [0, 0, 1, 1], [], []>} : vector<8x128xf32>, vector<128x512xf32>, vector<8x512xf32> -> vector<8x512xf32>
    %224 = arith.addf %222, %223 : vector<8x512xf32>
    %225 = vector.extract_strided_slice %224 {offsets = [0, 0], sizes = [8, 128], strides = [1, 1]} : vector<8x512xf32> to vector<8x128xf32>
    %226 = arith.negf %225 : vector<8x128xf32>
    %227 = math.exp %226 : vector<8x128xf32>
    %cst_61 = arith.constant 1.000000e+00 : f32
    %228 = vector.broadcast %cst_61 : f32 to vector<8x128xf32>
    %229 = arith.addf %228, %227 : vector<8x128xf32>
    %230 = arith.divf %228, %229 : vector<8x128xf32>
    %231 = vector.extract_strided_slice %224 {offsets = [0, 128], sizes = [8, 128], strides = [1, 1]} : vector<8x512xf32> to vector<8x128xf32>
    %232 = arith.negf %231 : vector<8x128xf32>
    %233 = math.exp %232 : vector<8x128xf32>
    %cst_62 = arith.constant 1.000000e+00 : f32
    %234 = vector.broadcast %cst_62 : f32 to vector<8x128xf32>
    %235 = arith.addf %234, %233 : vector<8x128xf32>
    %236 = arith.divf %234, %235 : vector<8x128xf32>
    %237 = vector.extract_strided_slice %224 {offsets = [0, 256], sizes = [8, 128], strides = [1, 1]} : vector<8x512xf32> to vector<8x128xf32>
    %238 = math.tanh %237 : vector<8x128xf32>
    %239 = vector.extract_strided_slice %224 {offsets = [0, 384], sizes = [8, 128], strides = [1, 1]} : vector<8x512xf32> to vector<8x128xf32>
    %240 = arith.negf %239 : vector<8x128xf32>
    %241 = math.exp %240 : vector<8x128xf32>
    %cst_63 = arith.constant 1.000000e+00 : f32
    %242 = vector.broadcast %cst_63 : f32 to vector<8x128xf32>
    %243 = arith.addf %242, %241 : vector<8x128xf32>
    %244 = arith.divf %242, %243 : vector<8x128xf32>
    %245 = arith.mulf %236, %218 : vector<8x128xf32>
    %246 = arith.mulf %230, %238 : vector<8x128xf32>
    %247 = arith.addf %245, %246 : vector<8x128xf32>
    %248 = math.tanh %247 : vector<8x128xf32>
    %249 = arith.mulf %244, %248 : vector<8x128xf32>
    %c0_64 = arith.constant 0 : index
    %c0_65 = arith.constant 0 : index
    %250 = vector.load %arg2[%c0_64, %c0_65] : memref<272x128xf32, #tpu.memory_space<vmem>>, vector<128x128xf32>
    %c128_66 = arith.constant 128 : index
    %c0_67 = arith.constant 0 : index
    %251 = vector.load %arg2[%c128_66, %c0_67] : memref<272x128xf32, #tpu.memory_space<vmem>>, vector<1x128xf32>
    %c136 = arith.constant 136 : index
    %c0_68 = arith.constant 0 : index
    %252 = vector.load %arg2[%c136, %c0_68] : memref<272x128xf32, #tpu.memory_space<vmem>>, vector<128x128xf32>
    %c264 = arith.constant 264 : index
    %c0_69 = arith.constant 0 : index
    %253 = vector.load %arg2[%c264, %c0_69] : memref<272x128xf32, #tpu.memory_space<vmem>>, vector<1x128xf32>
    %cst_70 = arith.constant dense<0.000000e+00> : vector<8x128xf32>
    %254 = tpu.matmul %249, %250, %cst_70 {dimension_numbers = #tpu.dot_dimension_numbers<[1], [0], [0], [1], [0, 0, 1, 1], [], []>} : vector<8x128xf32>, vector<128x128xf32>, vector<8x128xf32> -> vector<8x128xf32>
    %255 = vector.broadcast %251 : vector<1x128xf32> to vector<8x128xf32>
    %256 = arith.addf %254, %255 : vector<8x128xf32>
    %cst_71 = arith.constant 0.000000e+00 : f32
    %257 = vector.broadcast %cst_71 : f32 to vector<8x128xf32>
    %258 = arith.maximumf %256, %257 : vector<8x128xf32>
    %cst_72 = arith.constant dense<0.000000e+00> : vector<8x128xf32>
    %259 = tpu.matmul %258, %252, %cst_72 {dimension_numbers = #tpu.dot_dimension_numbers<[1], [0], [0], [1], [0, 0, 1, 1], [], []>} : vector<8x128xf32>, vector<128x128xf32>, vector<8x128xf32> -> vector<8x128xf32>
    %260 = vector.broadcast %253 : vector<1x128xf32> to vector<8x128xf32>
    %261 = arith.addf %259, %260 : vector<8x128xf32>
    %c0_73 = arith.constant 0 : index
    %c0_74 = arith.constant 0 : index
    %262 = vector.load %arg3[%c0_73, %c0_74] : memref<8x128xf32, #tpu.memory_space<vmem>>, vector<8x128xf32>
    tpu.vector_store %arg3[%c0_73, %c0_74], %261 {strides = array<i32>} : memref<8x128xf32, #tpu.memory_space<vmem>>, vector<8x128xf32>,
    return
  }
}

</mosaic_0001>

<llo_original>
// kernel: net_forward.1
$region0: #{net_forward.1}
  #allocation0 [shape = 'u32[]', space=smem, size = 0x4, offset = 0x4, fixed_abs, tag = 'smem constant byte address 0x4 - core index']
  #allocation1 [shape = 'u32[144,128]{1,0:T(1,128)}', space=vmem, size = 0x12000, scoped, tag = 'internal scratch']
  #allocation2 [shape = 'f32[64,512]{1,0:T(8,128)}', space=vmem, size = 0x20000, scoped, tag = 'scratch operand']
  %s0 = inlined_call_operand.vmem [shape: f32[64,2], index: 0, kind: input, shape index: {}]
  %s1 = inlined_call_operand.hbm [shape: f32[136,512], index: 1, kind: input, shape index: {}]
  %s2 = inlined_call_operand.hbm [shape: f32[272,128], index: 2, kind: input, shape index: {}]
  %s3 = inlined_call_operand.vmem [shape: f32[8,128], index: 3, kind: output, shape index: {}]
  %s4 = sld [smem:[#allocation0]]
  $region30: #{net_forward.1} parent=0
    _
  %s6 = ssub.s32 1, %s4
  %s7 = scalar_select 0, %s6, %s4
  $region1: #{net_forward.1} parent=0
    #allocation3 [shape = 'u8[278528]{0}', space=vmem, size = 0x44000, scoped, tag = 'input window, operand 1, single buffered']
    #allocation4 [shape = 's32[1]{0}', space=sflag, size = 0x4, scoped, tag = 'scoped memory for net_forward.1']
    #allocation5 [shape = 'u8[139264]{0}', space=vmem, size = 0x22000, scoped, tag = 'input window, operand 2, single buffered']
    #allocation6 [shape = 's32[1]{0}', space=sflag, size = 0x4, scoped, tag = 'scoped memory for net_forward.1']
    %8 = vsyncpa [#allocation4], 0
    %9 = vsyncpa [#allocation6], 0
    // Predicated region
    $region2: #{net_forward.1} parent=1 // pred_check
      _
    $region3: #{net_forward.1} parent=1 // pred_check_branch
      %11 = sbr.rel (0) target = $region5
    $region4: #{net_forward.1} parent=1 // pred_region
      _
    $region5: #{net_forward.1} parent=1 // pred_fallthru
      _
    // Predicated region
    $region6: #{net_forward.1} parent=1 // pred_check
      _
    $region7: #{net_forward.1} parent=1 // pred_check_branch
      %13 = sbr.rel (0) target = $region9
    $region8: #{net_forward.1} parent=1 // pred_region
      %s15 = ssub.s32 8704, 8704
      %16 = vsyncadd [#allocation4], %s15
      %s17 = sshll.u32 [#allocation3], 4
      %s18 = int_to_ptr.vmem [resolvable:$true] %s17
      %23 = dma.hbm_to_vmem [thread:$0]  %s1, 8704, %s18, [#allocation4], 512, 512, 32
    $region9: #{net_forward.1} parent=1 // pred_fallthru
      _
    // Predicated region
    $region10: #{net_forward.1} parent=1 // pred_check
      _
    $region11: #{net_forward.1} parent=1 // pred_check_branch
      %25 = sbr.rel (0) target = $region13
    $region12: #{net_forward.1} parent=1 // pred_region
      %s27 = ssub.s32 4352, 4352
      %28 = vsyncadd [#allocation6], %s27
      %s29 = sshll.u32 [#allocation5], 4
      %s30 = int_to_ptr.vmem [resolvable:$true] %s29
      %35 = dma.hbm_to_vmem [thread:$0]  %s2, 4352, %s30, [#allocation6], 128, 128, 8
    $region13: #{net_forward.1} parent=1 // pred_fallthru
      _
    // Predicated region
    $region14: #{net_forward.1} parent=1 // pred_check
      _
    $region15: #{net_forward.1} parent=1 // pred_check_branch
      %37 = sbr.rel (0) target = $region17
    $region16: #{net_forward.1} parent=1 // pred_region
      %38 = dma.done [#allocation4], 8704
    $region17: #{net_forward.1} parent=1 // pred_fallthru
      _
    // Predicated region
    $region18: #{net_forward.1} parent=1 // pred_check
      _
    $region19: #{net_forward.1} parent=1 // pred_check_branch
      %40 = sbr.rel (0) target = $region21
    $region20: #{net_forward.1} parent=1 // pred_region
      %41 = dma.done [#allocation6], 4352
    $region21: #{net_forward.1} parent=1 // pred_fallthru
      _
    %v42 = vld [vmem:[%s0] sm:$0xff]
    %v43 = vld [vmem:[%s0 + $0x8] sm:$0xff]
    %v44 = vld [vmem:[%s0 + $0x10] sm:$0xff]
    %v45 = vld [vmem:[%s0 + $0x18] sm:$0xff]
    %v46 = vld [vmem:[%s0 + $0x20] sm:$0xff]
    %v47 = vld [vmem:[%s0 + $0x28] sm:$0xff]
    %v48 = vld [vmem:[%s0 + $0x30] sm:$0xff]
    %v49 = vld [vmem:[%s0 + $0x38] sm:$0xff]
    %s50 = scalar_lea.vmem [#allocation3], 512
    %v51 = vld [vmem:[%s50] ss:$8 sm:$0xf]
    %s52 = scalar_lea.vmem [#allocation3], 513
    %v53 = vld [vmem:[%s52] ss:$8 sm:$0xf]
    %s54 = scalar_lea.vmem [#allocation3], 514
    %v55 = vld [vmem:[%s54] ss:$8 sm:$0xf]
    %57 = vset.pattern.permute.xlu0 0
    %58 = vperm.xlu0 %57, %v42
    %v59 = vpop.permute.xlu0 %58
    %62 = vset.pattern.permute.xlu0 0
    %63 = vperm.xlu0 %62, %v43
    %v64 = vpop.permute.xlu0 %63
    %67 = vset.pattern.permute.xlu0 0
    %68 = vperm.xlu0 %67, %v44
    %v69 = vpop.permute.xlu0 %68
    %72 = vset.pattern.permute.xlu0 0
    %73 = vperm.xlu0 %72, %v45
    %v74 = vpop.permute.xlu0 %73
    %77 = vset.pattern.permute.xlu0 0
    %78 = vperm.xlu0 %77, %v46
    %v79 = vpop.permute.xlu0 %78
    %82 = vset.pattern.permute.xlu0 0
    %83 = vperm.xlu0 %82, %v47
    %v84 = vpop.permute.xlu0 %83
    %87 = vset.pattern.permute.xlu0 0
    %88 = vperm.xlu0 %87, %v48
    %v89 = vpop.permute.xlu0 %88
    %92 = vset.pattern.permute.xlu0 0
    %93 = vperm.xlu0 %92, %v49
    %v94 = vpop.permute.xlu0 %93
    %v97 = vlaneseq
    %v98 = vshrl.u32 %v97, 7
    %v99 = vsub.s32 0, %v98
    %v100 = vrot.slane %v51, %v99
    %v101 = vlaneseq
    %v102 = vshrl.u32 %v101, 7
    %v103 = vsub.s32 1, %v102
    %v104 = vrot.slane %v51, %v103
    %v105 = vlaneseq
    %v106 = vshrl.u32 %v105, 7
    %v107 = vsub.s32 2, %v106
    %v108 = vrot.slane %v51, %v107
    %v109 = vlaneseq
    %v110 = vshrl.u32 %v109, 7
    %v111 = vsub.s32 3, %v110
    %v112 = vrot.slane %v51, %v111
    %v117 = vmul.f32 %v59, %v100
    %v118 = vmul.f32 %v59, %v104
    %v119 = vmul.f32 %v59, %v108
    %v120 = vmul.f32 %v59, %v112
    %v121 = vmul.f32 %v64, %v100
    %v122 = vmul.f32 %v64, %v104
    %v123 = vmul.f32 %v64, %v108
    %v124 = vmul.f32 %v64, %v112
    %v125 = vmul.f32 %v69, %v100
    %v126 = vmul.f32 %v69, %v104
    %v127 = vmul.f32 %v69, %v108
    %v128 = vmul.f32 %v69, %v112
    %v129 = vmul.f32 %v74, %v100
    %v130 = vmul.f32 %v74, %v104
    %v131 = vmul.f32 %v74, %v108
    %v132 = vmul.f32 %v74, %v112
    %v133 = vmul.f32 %v79, %v100
    %v134 = vmul.f32 %v79, %v104
    %v135 = vmul.f32 %v79, %v108
    %v136 = vmul.f32 %v79, %v112
    %v137 = vmul.f32 %v84, %v100
    %v138 = vmul.f32 %v84, %v104
    %v139 = vmul.f32 %v84, %v108
    %v140 = vmul.f32 %v84, %v112
    %v141 = vmul.f32 %v89, %v100
    %v142 = vmul.f32 %v89, %v104
    %v143 = vmul.f32 %v89, %v108
    %v144 = vmul.f32 %v89, %v112
    %v145 = vmul.f32 %v94, %v100
    %v146 = vmul.f32 %v94, %v104
    %v147 = vmul.f32 %v94, %v108
    %v148 = vmul.f32 %v94, %v112
    %149 = vset.pattern.permute.xlu0 1
    %150 = vperm.xlu0 %149, %v42
    %v151 = vpop.permute.xlu0 %150
    %153 = vset.pattern.permute.xlu0 1
    %154 = vperm.xlu0 %153, %v43
    %v155 = vpop.permute.xlu0 %154
    %157 = vset.pattern.permute.xlu0 1
    %158 = vperm.xlu0 %157, %v44
    %v159 = vpop.permute.xlu0 %158
    %161 = vset.pattern.permute.xlu0 1
    %162 = vperm.xlu0 %161, %v45
    %v163 = vpop.permute.xlu0 %162
    %165 = vset.pattern.permute.xlu0 1
    %166 = vperm.xlu0 %165, %v46
    %v167 = vpop.permute.xlu0 %166
    %169 = vset.pattern.permute.xlu0 1
    %170 = vperm.xlu0 %169, %v47
    %v171 = vpop.permute.xlu0 %170
    %173 = vset.pattern.permute.xlu0 1
    %174 = vperm.xlu0 %173, %v48
    %v175 = vpop.permute.xlu0 %174
    %177 = vset.pattern.permute.xlu0 1
    %178 = vperm.xlu0 %177, %v49
    %v179 = vpop.permute.xlu0 %178
    %v182 = vlaneseq
    %v183 = vshrl.u32 %v182, 7
    %v184 = vsub.s32 0, %v183
    %v185 = vrot.slane %v53, %v184
    %v186 = vlaneseq
    %v187 = vshrl.u32 %v186, 7
    %v188 = vsub.s32 1, %v187
    %v189 = vrot.slane %v53, %v188
    %v190 = vlaneseq
    %v191 = vshrl.u32 %v190, 7
    %v192 = vsub.s32 2, %v191
    %v193 = vrot.slane %v53, %v192
    %v194 = vlaneseq
    %v195 = vshrl.u32 %v194, 7
    %v196 = vsub.s32 3, %v195
    %v197 = vrot.slane %v53, %v196
    %v202 = vmul.f32 %v151, %v185
    %v203 = vmul.f32 %v151, %v189
    %v204 = vmul.f32 %v151, %v193
    %v205 = vmul.f32 %v151, %v197
    %v206 = vmul.f32 %v155, %v185
    %v207 = vmul.f32 %v155, %v189
    %v208 = vmul.f32 %v155, %v193
    %v209 = vmul.f32 %v155, %v197
    %v210 = vmul.f32 %v159, %v185
    %v211 = vmul.f32 %v159, %v189
    %v212 = vmul.f32 %v159, %v193
    %v213 = vmul.f32 %v159, %v197
    %v214 = vmul.f32 %v163, %v185
    %v215 = vmul.f32 %v163, %v189
    %v216 = vmul.f32 %v163, %v193
    %v217 = vmul.f32 %v163, %v197
    %v218 = vmul.f32 %v167, %v185
    %v219 = vmul.f32 %v167, %v189
    %v220 = vmul.f32 %v167, %v193
    %v221 = vmul.f32 %v167, %v197
    %v222 = vmul.f32 %v171, %v185
    %v223 = vmul.f32 %v171, %v189
    %v224 = vmul.f32 %v171, %v193
    %v225 = vmul.f32 %v171, %v197
    %v226 = vmul.f32 %v175, %v185
    %v227 = vmul.f32 %v175, %v189
    %v228 = vmul.f32 %v175, %v193
    %v229 = vmul.f32 %v175, %v197
    %v230 = vmul.f32 %v179, %v185
    %v231 = vmul.f32 %v179, %v189
    %v232 = vmul.f32 %v179, %v193
    %v233 = vmul.f32 %v179, %v197
    %v234 = vadd.f32 %v117, %v202
    %v235 = vadd.f32 %v118, %v203
    %v236 = vadd.f32 %v119, %v204
    %v237 = vadd.f32 %v120, %v205
    %v238 = vadd.f32 %v121, %v206
    %v239 = vadd.f32 %v122, %v207
    %v240 = vadd.f32 %v123, %v208
    %v241 = vadd.f32 %v124, %v209
    %v242 = vadd.f32 %v125, %v210
    %v243 = vadd.f32 %v126, %v211
    %v244 = vadd.f32 %v127, %v212
    %v245 = vadd.f32 %v128, %v213
    %v246 = vadd.f32 %v129, %v214
    %v247 = vadd.f32 %v130, %v215
    %v248 = vadd.f32 %v131, %v216
    %v249 = vadd.f32 %v132, %v217
    %v250 = vadd.f32 %v133, %v218
    %v251 = vadd.f32 %v134, %v219
    %v252 = vadd.f32 %v135, %v220
    %v253 = vadd.f32 %v136, %v221
    %v254 = vadd.f32 %v137, %v222
    %v255 = vadd.f32 %v138, %v223
    %v256 = vadd.f32 %v139, %v224
    %v257 = vadd.f32 %v140, %v225
    %v258 = vadd.f32 %v141, %v226
    %v259 = vadd.f32 %v142, %v227
    %v260 = vadd.f32 %v143, %v228
    %v261 = vadd.f32 %v144, %v229
    %v262 = vadd.f32 %v145, %v230
    %v263 = vadd.f32 %v146, %v231
    %v264 = vadd.f32 %v147, %v232
    %v265 = vadd.f32 %v148, %v233
    %v267 = vlaneseq
    %v268 = vshrl.u32 %v267, 7
    %v269 = vsub.s32 0, %v268
    %v270 = vrot.slane %v55, %v269
    %v271 = vlaneseq
    %v272 = vshrl.u32 %v271, 7
    %v273 = vsub.s32 1, %v272
    %v274 = vrot.slane %v55, %v273
    %v275 = vlaneseq
    %v276 = vshrl.u32 %v275, 7
    %v277 = vsub.s32 2, %v276
    %v278 = vrot.slane %v55, %v277
    %v279 = vlaneseq
    %v280 = vshrl.u32 %v279, 7
    %v281 = vsub.s32 3, %v280
    %v282 = vrot.slane %v55, %v281
    %v287 = vadd.f32 %v234, %v270
    %v288 = vadd.f32 %v235, %v274
    %v289 = vadd.f32 %v236, %v278
    %v290 = vadd.f32 %v237, %v282
    %v291 = vadd.f32 %v238, %v270
    %v292 = vadd.f32 %v239, %v274
    %v293 = vadd.f32 %v240, %v278
    %v294 = vadd.f32 %v241, %v282
    %v295 = vadd.f32 %v242, %v270
    %v296 = vadd.f32 %v243, %v274
    %v297 = vadd.f32 %v244, %v278
    %v298 = vadd.f32 %v245, %v282
    %v299 = vadd.f32 %v246, %v270
    %v300 = vadd.f32 %v247, %v274
    %v301 = vadd.f32 %v248, %v278
    %v302 = vadd.f32 %v249, %v282
    %v303 = vadd.f32 %v250, %v270
    %v304 = vadd.f32 %v251, %v274
    %v305 = vadd.f32 %v252, %v278
    %v306 = vadd.f32 %v253, %v282
    %v307 = vadd.f32 %v254, %v270
    %v308 = vadd.f32 %v255, %v274
    %v309 = vadd.f32 %v256, %v278
    %v310 = vadd.f32 %v257, %v282
    %v311 = vadd.f32 %v258, %v270
    %v312 = vadd.f32 %v259, %v274
    %v313 = vadd.f32 %v260, %v278
    %v314 = vadd.f32 %v261, %v282
    %v315 = vadd.f32 %v262, %v270
    %v316 = vadd.f32 %v263, %v274
    %v317 = vadd.f32 %v264, %v278
    %v318 = vadd.f32 %v265, %v282
    %319 = vst [vmem:[#allocation2] sm:$0xff] %v287
    %320 = vst [vmem:[#allocation2 + $0x8] sm:$0xff] %v288
    %321 = vst [vmem:[#allocation2 + $0x10] sm:$0xff] %v289
    %322 = vst [vmem:[#allocation2 + $0x18] sm:$0xff] %v290
    %323 = vst [vmem:[#allocation2 + $0x20] sm:$0xff] %v291
    %324 = vst [vmem:[#allocation2 + $0x28] sm:$0xff] %v292
    %325 = vst [vmem:[#allocation2 + $0x30] sm:$0xff] %v293
    %326 = vst [vmem:[#allocation2 + $0x38] sm:$0xff] %v294
    %327 = vst [vmem:[#allocation2 + $0x40] sm:$0xff] %v295
    %328 = vst [vmem:[#allocation2 + $0x48] sm:$0xff] %v296
    %329 = vst [vmem:[#allocation2 + $0x50] sm:$0xff] %v297
    %330 = vst [vmem:[#allocation2 + $0x58] sm:$0xff] %v298
    %331 = vst [vmem:[#allocation2 + $0x60] sm:$0xff] %v299
    %332 = vst [vmem:[#allocation2 + $0x68] sm:$0xff] %v300
    %333 = vst [vmem:[#allocation2 + $0x70] sm:$0xff] %v301
    %334 = vst [vmem:[#allocation2 + $0x78] sm:$0xff] %v302
    %335 = vst [vmem:[#allocation2 + $0x80] sm:$0xff] %v303
    %336 = vst [vmem:[#allocation2 + $0x88] sm:$0xff] %v304
    %337 = vst [vmem:[#allocation2 + $0x90] sm:$0xff] %v305
    %338 = vst [vmem:[#allocation2 + $0x98] sm:$0xff] %v306
    %339 = vst [vmem:[#allocation2 + $0xa0] sm:$0xff] %v307
    %340 = vst [vmem:[#allocation2 + $0xa8] sm:$0xff] %v308
    %341 = vst [vmem:[#allocation2 + $0xb0] sm:$0xff] %v309
    %342 = vst [vmem:[#allocation2 + $0xb8] sm:$0xff] %v310
    %343 = vst [vmem:[#allocation2 + $0xc0] sm:$0xff] %v311
    %344 = vst [vmem:[#allocation2 + $0xc8] sm:$0xff] %v312
    %345 = vst [vmem:[#allocation2 + $0xd0] sm:$0xff] %v313
    %346 = vst [vmem:[#allocation2 + $0xd8] sm:$0xff] %v314
    %347 = vst [vmem:[#allocation2 + $0xe0] sm:$0xff] %v315
    %348 = vst [vmem:[#allocation2 + $0xe8] sm:$0xff] %v316
    %349 = vst [vmem:[#allocation2 + $0xf0] sm:$0xff] %v317
    %350 = vst [vmem:[#allocation2 + $0xf8] sm:$0xff] %v318
    %v351 = vld [vmem:[#allocation3] sm:$0xff]
    %v352 = vld [vmem:[#allocation3 + $0x8] sm:$0xff]
    %v353 = vld [vmem:[#allocation3 + $0x10] sm:$0xff]
    %v354 = vld [vmem:[#allocation3 + $0x18] sm:$0xff]
    %v355 = vld [vmem:[#allocation3 + $0x20] sm:$0xff]
    %v356 = vld [vmem:[#allocation3 + $0x28] sm:$0xff]
    %v357 = vld [vmem:[#allocation3 + $0x30] sm:$0xff]
    %v358 = vld [vmem:[#allocation3 + $0x38] sm:$0xff]
    %v359 = vld [vmem:[#allocation3 + $0x40] sm:$0xff]
    %v360 = vld [vmem:[#allocation3 + $0x48] sm:$0xff]
    %v361 = vld [vmem:[#allocation3 + $0x50] sm:$0xff]
    %v362 = vld [vmem:[#allocation3 + $0x58] sm:$0xff]
    %v363 = vld [vmem:[#allocation3 + $0x60] sm:$0xff]
    %v364 = vld [vmem:[#allocation3 + $0x68] sm:$0xff]
    %v365 = vld [vmem:[#allocation3 + $0x70] sm:$0xff]
    %v366 = vld [vmem:[#allocation3 + $0x78] sm:$0xff]
    %v367 = vld [vmem:[#allocation3 + $0x80] sm:$0xff]
    %v368 = vld [vmem:[#allocation3 + $0x88] sm:$0xff]
    %v369 = vld [vmem:[#allocation3 + $0x90] sm:$0xff]
    %v370 = vld [vmem:[#allocation3 + $0x98] sm:$0xff]
    %v371 = vld [vmem:[#allocation3 + $0xa0] sm:$0xff]
    %v372 = vld [vmem:[#allocation3 + $0xa8] sm:$0xff]
    %v373 = vld [vmem:[#allocation3 + $0xb0] sm:$0xff]
    %v374 = vld [vmem:[#allocation3 + $0xb8] sm:$0xff]
    %v375 = vld [vmem:[#allocation3 + $0xc0] sm:$0xff]
    %v376 = vld [vmem:[#allocation3 + $0xc8] sm:$0xff]
    %v377 = vld [vmem:[#allocation3 + $0xd0] sm:$0xff]
    %v378 = vld [vmem:[#allocation3 + $0xd8] sm:$0xff]
    %v379 = vld [vmem:[#allocation3 + $0xe0] sm:$0xff]
    %v380 = vld [vmem:[#allocation3 + $0xe8] sm:$0xff]
    %v381 = vld [vmem:[#allocation3 + $0xf0] sm:$0xff]
    %v382 = vld [vmem:[#allocation3 + $0xf8] sm:$0xff]
    %v383 = vld [vmem:[#allocation3 + $0x100] sm:$0xff]
    %v384 = vld [vmem:[#allocation3 + $0x108] sm:$0xff]
    %v385 = vld [vmem:[#allocation3 + $0x110] sm:$0xff]
    %v386 = vld [vmem:[#allocation3 + $0x118] sm:$0xff]
    %v387 = vld [vmem:[#allocation3 + $0x120] sm:$0xff]
    %v388 = vld [vmem:[#allocation3 + $0x128] sm:$0xff]
    %v389 = vld [vmem:[#allocation3 + $0x130] sm:$0xff]
    %v390 = vld [vmem:[#allocation3 + $0x138] sm:$0xff]
    %v391 = vld [vmem:[#allocation3 + $0x140] sm:$0xff]
    %v392 = vld [vmem:[#allocation3 + $0x148] sm:$0xff]
    %v393 = vld [vmem:[#allocation3 + $0x150] sm:$0xff]
    %v394 = vld [vmem:[#allocation3 + $0x158] sm:$0xff]
    %v395 = vld [vmem:[#allocation3 + $0x160] sm:$0xff]
    %v396 = vld [vmem:[#allocation3 + $0x168] sm:$0xff]
    %v397 = vld [vmem:[#allocation3 + $0x170] sm:$0xff]
    %v398 = vld [vmem:[#allocation3 + $0x178] sm:$0xff]
    %v399 = vld [vmem:[#allocation3 + $0x180] sm:$0xff]
    %v400 = vld [vmem:[#allocation3 + $0x188] sm:$0xff]
    %v401 = vld [vmem:[#allocation3 + $0x190] sm:$0xff]
    %v402 = vld [vmem:[#allocation3 + $0x198] sm:$0xff]
    %v403 = vld [vmem:[#allocation3 + $0x1a0] sm:$0xff]
    %v404 = vld [vmem:[#allocation3 + $0x1a8] sm:$0xff]
    %v405 = vld [vmem:[#allocation3 + $0x1b0] sm:$0xff]
    %v406 = vld [vmem:[#allocation3 + $0x1b8] sm:$0xff]
    %v407 = vld [vmem:[#allocation3 + $0x1c0] sm:$0xff]
    %v408 = vld [vmem:[#allocation3 + $0x1c8] sm:$0xff]
    %v409 = vld [vmem:[#allocation3 + $0x1d0] sm:$0xff]
    %v410 = vld [vmem:[#allocation3 + $0x1d8] sm:$0xff]
    %v411 = vld [vmem:[#allocation3 + $0x1e0] sm:$0xff]
    %v412 = vld [vmem:[#allocation3 + $0x1e8] sm:$0xff]
    %v413 = vld [vmem:[#allocation3 + $0x1f0] sm:$0xff]
    %v414 = vld [vmem:[#allocation3 + $0x1f8] sm:$0xff]
    %v415 = vld [vmem:[#allocation2] sm:$0xff]
    %v416 = vld [vmem:[#allocation2 + $0x8] sm:$0xff]
    %v417 = vld [vmem:[#allocation2 + $0x10] sm:$0xff]
    %v418 = vld [vmem:[#allocation2 + $0x18] sm:$0xff]
    %419 = vmatprep.subr.mxu0 %v352
    %420 = vmatpush1.msra.mxu0 %v351
    %421 = vmatprep.subr.mxu0 %v356
    %422 = vmatpush1.msra.mxu0 %v355
    %423 = vmatprep.subr.mxu0 %v360
    %424 = vmatpush1.msra.mxu0 %v359
    %425 = vmatprep.subr.mxu0 %v364
    %426 = vmatpush1.msra.mxu0 %v363
    %427 = vmatprep.subr.mxu0 %v368
    %428 = vmatpush1.msra.mxu0 %v367
    %429 = vmatprep.subr.mxu0 %v372
    %430 = vmatpush1.msra.mxu0 %v371
    %431 = vmatprep.subr.mxu0 %v376
    %432 = vmatpush1.msra.mxu0 %v375
    %433 = vmatprep.subr.mxu0 %v380
    %434 = vmatpush1.msra.mxu0 %v379
    %435 = vmatprep.subr.mxu0 %v384
    %436 = vmatpush1.msra.mxu0 %v383
    %437 = vmatprep.subr.mxu0 %v388
    %438 = vmatpush1.msra.mxu0 %v387
    %439 = vmatprep.subr.mxu0 %v392
    %440 = vmatpush1.msra.mxu0 %v391
    %441 = vmatprep.subr.mxu0 %v396
    %442 = vmatpush1.msra.mxu0 %v395
    %443 = vmatprep.subr.mxu0 %v400
    %444 = vmatpush1.msra.mxu0 %v399
    %445 = vmatprep.subr.mxu0 %v404
    %446 = vmatpush1.msra.mxu0 %v403
    %447 = vmatprep.subr.mxu0 %v408
    %448 = vmatpush1.msra.mxu0 %v407
    %449 = vmatprep.subr.mxu0 %v412
    %450 = vmatpush1.msra.mxu0 %v411
    %451 = vmatprep.subr.mxu0 0.0
    %452 = vmatpush1.msra.mxu0 0.0
    %453 = vmatprep.subr.mxu0 0.0
    %454 = vmatpush1.msra.mxu0 0.0
    %455 = vmatprep.subr.mxu0 0.0
    %456 = vmatpush1.msra.mxu0 0.0
    %457 = vmatprep.subr.mxu0 0.0
    %458 = vmatpush1.msra.mxu0 0.0
    %459 = vmatprep.subr.mxu0 0.0
    %460 = vmatpush1.msra.mxu0 0.0
    %461 = vmatprep.subr.mxu0 0.0
    %462 = vmatpush1.msra.mxu0 0.0
    %463 = vmatprep.subr.mxu0 0.0
    %464 = vmatpush1.msra.mxu0 0.0
    %465 = vmatprep.subr.mxu0 0.0
    %466 = vmatpush1.msra.mxu0 0.0
    %467 = vmatprep.subr.mxu0 0.0
    %468 = vmatpush1.msra.mxu0 0.0
    %469 = vmatprep.subr.mxu0 0.0
    %470 = vmatpush1.msra.mxu0 0.0
    %471 = vmatprep.subr.mxu0 0.0
    %472 = vmatpush1.msra.mxu0 0.0
    %473 = vmatprep.subr.mxu0 0.0
    %474 = vmatpush1.msra.mxu0 0.0
    %475 = vmatprep.subr.mxu0 0.0
    %476 = vmatpush1.msra.mxu0 0.0
    %477 = vmatprep.subr.mxu0 0.0
    %478 = vmatpush1.msra.mxu0 0.0
    %479 = vmatprep.subr.mxu0 0.0
    %480 = vmatpush1.msra.mxu0 0.0
    %481 = vmatprep.subr.mxu0 0.0
    %482 = vmatpush1.msra.mxu0 0.0
    %483 = vmatprep.mubr.f32.mxu0 0.0
    %484 = vmatmul.mubr.f32.gmra.mrb[0].mxu0 0.0
    %v485 = vpop.f32.mrb[0].mxu0
    %v486 = vadd.f32 0.0, %v485
    %v487 = vpop.f32.mrb[0].mxu0
    %v488 = vadd.f32 0.0, %v487
    %489 = vdwg.mxu0
    %490 = vmatprep.subr.mxu0 %v354
    %491 = vmatpush1.msra.mxu0 %v353
    %492 = vmatprep.subr.mxu0 %v358
    %493 = vmatpush1.msra.mxu0 %v357
    %494 = vmatprep.subr.mxu0 %v362
    %495 = vmatpush1.msra.mxu0 %v361
    %496 = vmatprep.subr.mxu0 %v366
    %497 = vmatpush1.msra.mxu0 %v365
    %498 = vmatprep.subr.mxu0 %v370
    %499 = vmatpush1.msra.mxu0 %v369
    %500 = vmatprep.subr.mxu0 %v374
    %501 = vmatpush1.msra.mxu0 %v373
    %502 = vmatprep.subr.mxu0 %v378
    %503 = vmatpush1.msra.mxu0 %v377
    %504 = vmatprep.subr.mxu0 %v382
    %505 = vmatpush1.msra.mxu0 %v381
    %506 = vmatprep.subr.mxu0 %v386
    %507 = vmatpush1.msra.mxu0 %v385
    %508 = vmatprep.subr.mxu0 %v390
    %509 = vmatpush1.msra.mxu0 %v389
    %510 = vmatprep.subr.mxu0 %v394
    %511 = vmatpush1.msra.mxu0 %v393
    %512 = vmatprep.subr.mxu0 %v398
    %513 = vmatpush1.msra.mxu0 %v397
    %514 = vmatprep.subr.mxu0 %v402
    %515 = vmatpush1.msra.mxu0 %v401
    %516 = vmatprep.subr.mxu0 %v406
    %517 = vmatpush1.msra.mxu0 %v405
    %518 = vmatprep.subr.mxu0 %v410
    %519 = vmatpush1.msra.mxu0 %v409
    %520 = vmatprep.subr.mxu0 %v414
    %521 = vmatpush1.msra.mxu0 %v413
    %522 = vmatprep.subr.mxu0 0.0
    %523 = vmatpush1.msra.mxu0 0.0
    %524 = vmatprep.subr.mxu0 0.0
    %525 = vmatpush1.msra.mxu0 0.0
    %526 = vmatprep.subr.mxu0 0.0
    %527 = vmatpush1.msra.mxu0 0.0
    %528 = vmatprep.subr.mxu0 0.0
    %529 = vmatpush1.msra.mxu0 0.0
    %530 = vmatprep.subr.mxu0 0.0
    %531 = vmatpush1.msra.mxu0 0.0
    %532 = vmatprep.subr.mxu0 0.0
    %533 = vmatpush1.msra.mxu0 0.0
    %534 = vmatprep.subr.mxu0 0.0
    %535 = vmatpush1.msra.mxu0 0.0
    %536 = vmatprep.subr.mxu0 0.0
    %537 = vmatpush1.msra.mxu0 0.0
    %538 = vmatprep.subr.mxu0 0.0
    %539 = vmatpush1.msra.mxu0 0.0
    %540 = vmatprep.subr.mxu0 0.0
    %541 = vmatpush1.msra.mxu0 0.0
    %542 = vmatprep.subr.mxu0 0.0
    %543 = vmatpush1.msra.mxu0 0.0
    %544 = vmatprep.subr.mxu0 0.0
    %545 = vmatpush1.msra.mxu0 0.0
    %546 = vmatprep.subr.mxu0 0.0
    %547 = vmatpush1.msra.mxu0 0.0
    %548 = vmatprep.subr.mxu0 0.0
    %549 = vmatpush1.msra.mxu0 0.0
    %550 = vmatprep.subr.mxu0 0.0
    %551 = vmatpush1.msra.mxu0 0.0
    %552 = vmatprep.subr.mxu0 0.0
    %553 = vmatpush1.msra.mxu0 0.0
    %554 = vmatprep.mubr.f32.mxu0 0.0
    %555 = vmatmul.mubr.f32.gmra.mrb[0].mxu0 0.0
    %v556 = vpop.f32.mrb[0].mxu0
    %v557 = vadd.f32 0.0, %v556
    %v558 = vpop.f32.mrb[0].mxu0
    %v559 = vadd.f32 0.0, %v558
    %560 = vdwg.mxu0
    %v561 = vadd.f32 %v415, %v486
    %v562 = vadd.f32 %v416, %v488
    %v563 = vadd.f32 %v417, %v557
    %v564 = vadd.f32 %v418, %v559
    %v565 = vxor.u32 %v561, 2147483648
    %v566 = vmul.f32 %v565, 1.442695
    %v567 = vpow.pop %v566
    %v568 = vadd.f32 %v567, 1.0
    %v569 = vrcp.pop %v568
    %v570 = vmul.f32 1.0, %v569
    %v571 = vxor.u32 %v562, 2147483648
    %v572 = vmul.f32 %v571, 1.442695
    %v573 = vpow.pop %v572
    %v574 = vadd.f32 %v573, 1.0
    %v575 = vrcp.pop %v574
    %v576 = vmul.f32 1.0, %v575
    %v577 = vtanh.pop %v563
    %v578 = vxor.u32 %v564, 2147483648
    %v579 = vmul.f32 %v578, 1.442695
    %v580 = vpow.pop %v579
    %v581 = vadd.f32 %v580, 1.0
    %v582 = vrcp.pop %v581
    %v583 = vmul.f32 1.0, %v582
    %v584 = vmul.f32 %v576, 0.0
    %v585 = vmul.f32 %v570, %v577
    %v586 = vadd.f32 %v584, %v585
    %v587 = vtanh.pop %v586
    %v588 = vmul.f32 %v583, %v587
    %v589 = vld [vmem:[#allocation2 + $0x20] sm:$0xff]
    %v590 = vld [vmem:[#allocation2 + $0x28] sm:$0xff]
    %v591 = vld [vmem:[#allocation2 + $0x30] sm:$0xff]
    %v592 = vld [vmem:[#allocation2 + $0x38] sm:$0xff]
    %593 = vmatprep.subr.mxu0 %v352
    %594 = vmatpush1.msra.mxu0 %v351
    %595 = vmatprep.subr.mxu0 %v356
    %596 = vmatpush1.msra.mxu0 %v355
    %597 = vmatprep.subr.mxu0 %v360
    %598 = vmatpush1.msra.mxu0 %v359
    %599 = vmatprep.subr.mxu0 %v364
    %600 = vmatpush1.msra.mxu0 %v363
    %601 = vmatprep.subr.mxu0 %v368
    %602 = vmatpush1.msra.mxu0 %v367
    %603 = vmatprep.subr.mxu0 %v372
    %604 = vmatpush1.msra.mxu0 %v371
    %605 = vmatprep.subr.mxu0 %v376
    %606 = vmatpush1.msra.mxu0 %v375
    %607 = vmatprep.subr.mxu0 %v380
    %608 = vmatpush1.msra.mxu0 %v379
    %609 = vmatprep.subr.mxu0 %v384
    %610 = vmatpush1.msra.mxu0 %v383
    %611 = vmatprep.subr.mxu0 %v388
    %612 = vmatpush1.msra.mxu0 %v387
    %613 = vmatprep.subr.mxu0 %v392
    %614 = vmatpush1.msra.mxu0 %v391
    %615 = vmatprep.subr.mxu0 %v396
    %616 = vmatpush1.msra.mxu0 %v395
    %617 = vmatprep.subr.mxu0 %v400
    %618 = vmatpush1.msra.mxu0 %v399
    %619 = vmatprep.subr.mxu0 %v404
    %620 = vmatpush1.msra.mxu0 %v403
    %621 = vmatprep.subr.mxu0 %v408
    %622 = vmatpush1.msra.mxu0 %v407
    %623 = vmatprep.subr.mxu0 %v412
    %624 = vmatpush1.msra.mxu0 %v411
    %625 = vmatprep.subr.mxu0 0.0
    %626 = vmatpush1.msra.mxu0 0.0
    %627 = vmatprep.subr.mxu0 0.0
    %628 = vmatpush1.msra.mxu0 0.0
    %629 = vmatprep.subr.mxu0 0.0
    %630 = vmatpush1.msra.mxu0 0.0
    %631 = vmatprep.subr.mxu0 0.0
    %632 = vmatpush1.msra.mxu0 0.0
    %633 = vmatprep.subr.mxu0 0.0
    %634 = vmatpush1.msra.mxu0 0.0
    %635 = vmatprep.subr.mxu0 0.0
    %636 = vmatpush1.msra.mxu0 0.0
    %637 = vmatprep.subr.mxu0 0.0
    %638 = vmatpush1.msra.mxu0 0.0
    %639 = vmatprep.subr.mxu0 0.0
    %640 = vmatpush1.msra.mxu0 0.0
    %641 = vmatprep.subr.mxu0 0.0
    %642 = vmatpush1.msra.mxu0 0.0
    %643 = vmatprep.subr.mxu0 0.0
    %644 = vmatpush1.msra.mxu0 0.0
    %645 = vmatprep.subr.mxu0 0.0
    %646 = vmatpush1.msra.mxu0 0.0
    %647 = vmatprep.subr.mxu0 0.0
    %648 = vmatpush1.msra.mxu0 0.0
    %649 = vmatprep.subr.mxu0 0.0
    %650 = vmatpush1.msra.mxu0 0.0
    %651 = vmatprep.subr.mxu0 0.0
    %652 = vmatpush1.msra.mxu0 0.0
    %653 = vmatprep.subr.mxu0 0.0
    %654 = vmatpush1.msra.mxu0 0.0
    %655 = vmatprep.subr.mxu0 0.0
    %656 = vmatpush1.msra.mxu0 0.0
    %657 = vmatprep.mubr.f32.mxu0 0.0
    %658 = vmatmul.mubr.f32.gmra.mrb[0].mxu0 %v588
    %v659 = vpop.f32.mrb[0].mxu0
    %v660 = vadd.f32 0.0, %v659
    %v661 = vpop.f32.mrb[0].mxu0
    %v662 = vadd.f32 0.0, %v661
    %663 = vdwg.mxu0
    %664 = vmatprep.subr.mxu0 %v354
    %665 = vmatpush1.msra.mxu0 %v353
    %666 = vmatprep.subr.mxu0 %v358
    %667 = vmatpush1.msra.mxu0 %v357
    %668 = vmatprep.subr.mxu0 %v362
    %669 = vmatpush1.msra.mxu0 %v361
    %670 = vmatprep.subr.mxu0 %v366
    %671 = vmatpush1.msra.mxu0 %v365
    %672 = vmatprep.subr.mxu0 %v370
    %673 = vmatpush1.msra.mxu0 %v369
    %674 = vmatprep.subr.mxu0 %v374
    %675 = vmatpush1.msra.mxu0 %v373
    %676 = vmatprep.subr.mxu0 %v378
    %677 = vmatpush1.msra.mxu0 %v377
    %678 = vmatprep.subr.mxu0 %v382
    %679 = vmatpush1.msra.mxu0 %v381
    %680 = vmatprep.subr.mxu0 %v386
    %681 = vmatpush1.msra.mxu0 %v385
    %682 = vmatprep.subr.mxu0 %v390
    %683 = vmatpush1.msra.mxu0 %v389
    %684 = vmatprep.subr.mxu0 %v394
    %685 = vmatpush1.msra.mxu0 %v393
    %686 = vmatprep.subr.mxu0 %v398
    %687 = vmatpush1.msra.mxu0 %v397
    %688 = vmatprep.subr.mxu0 %v402
    %689 = vmatpush1.msra.mxu0 %v401
    %690 = vmatprep.subr.mxu0 %v406
    %691 = vmatpush1.msra.mxu0 %v405
    %692 = vmatprep.subr.mxu0 %v410
    %693 = vmatpush1.msra.mxu0 %v409
    %694 = vmatprep.subr.mxu0 %v414
    %695 = vmatpush1.msra.mxu0 %v413
    %696 = vmatprep.subr.mxu0 0.0
    %697 = vmatpush1.msra.mxu0 0.0
    %698 = vmatprep.subr.mxu0 0.0
    %699 = vmatpush1.msra.mxu0 0.0
    %700 = vmatprep.subr.mxu0 0.0
    %701 = vmatpush1.msra.mxu0 0.0
    %702 = vmatprep.subr.mxu0 0.0
    %703 = vmatpush1.msra.mxu0 0.0
    %704 = vmatprep.subr.mxu0 0.0
    %705 = vmatpush1.msra.mxu0 0.0
    %706 = vmatprep.subr.mxu0 0.0
    %707 = vmatpush1.msra.mxu0 0.0
    %708 = vmatprep.subr.mxu0 0.0
    %709 = vmatpush1.msra.mxu0 0.0
    %710 = vmatprep.subr.mxu0 0.0
    %711 = vmatpush1.msra.mxu0 0.0
    %712 = vmatprep.subr.mxu0 0.0
    %713 = vmatpush1.msra.mxu0 0.0
    %714 = vmatprep.subr.mxu0 0.0
    %715 = vmatpush1.msra.mxu0 0.0
    %716 = vmatprep.subr.mxu0 0.0
    %717 = vmatpush1.msra.mxu0 0.0
    %718 = vmatprep.subr.mxu0 0.0
    %719 = vmatpush1.msra.mxu0 0.0
    %720 = vmatprep.subr.mxu0 0.0
    %721 = vmatpush1.msra.mxu0 0.0
    %722 = vmatprep.subr.mxu0 0.0
    %723 = vmatpush1.msra.mxu0 0.0
    %724 = vmatprep.subr.mxu0 0.0
    %725 = vmatpush1.msra.mxu0 0.0
    %726 = vmatprep.subr.mxu0 0.0
    %727 = vmatpush1.msra.mxu0 0.0
    %728 = vmatprep.mubr.f32.mxu0 0.0
    %729 = vmatmul.mubr.f32.gmra.mrb[0].mxu0 %v588
    %v730 = vpop.f32.mrb[0].mxu0
    %v731 = vadd.f32 0.0, %v730
    %v732 = vpop.f32.mrb[0].mxu0
    %v733 = vadd.f32 0.0, %v732
    %734 = vdwg.mxu0
    %v735 = vadd.f32 %v589, %v660
    %v736 = vadd.f32 %v590, %v662
    %v737 = vadd.f32 %v591, %v731
    %v738 = vadd.f32 %v592, %v733
    %v739 = vxor.u32 %v735, 2147483648
    %v740 = vmul.f32 %v739, 1.442695
    %v741 = vpow.pop %v740
    %v742 = vadd.f32 %v741, 1.0
    %v743 = vrcp.pop %v742
    %v744 = vmul.f32 1.0, %v743
    %v745 = vxor.u32 %v736, 2147483648
    %v746 = vmul.f32 %v745, 1.442695
    %v747 = vpow.pop %v746
    %v748 = vadd.f32 %v747, 1.0
    %v749 = vrcp.pop %v748
    %v750 = vmul.f32 1.0, %v749
    %v751 = vtanh.pop %v737
    %v752 = vxor.u32 %v738, 2147483648
    %v753 = vmul.f32 %v752, 1.442695
    %v754 = vpow.pop %v753
    %v755 = vadd.f32 %v754, 1.0
    %v756 = vrcp.pop %v755
    %v757 = vmul.f32 1.0, %v756
    %v758 = vmul.f32 %v750, %v586
    %v759 = vmul.f32 %v744, %v751
    %v760 = vadd.f32 %v758, %v759
    %v761 = vtanh.pop %v760
    %v762 = vmul.f32 %v757, %v761
    %v763 = vld [vmem:[#allocation2 + $0x40] sm:$0xff]
    %v764 = vld [vmem:[#allocation2 + $0x48] sm:$0xff]
    %v765 = vld [vmem:[#allocation2 + $0x50] sm:$0xff]
    %v766 = vld [vmem:[#allocation2 + $0x58] sm:$0xff]
    %767 = vmatprep.subr.mxu0 %v352
    %768 = vmatpush1.msra.mxu0 %v351
    %769 = vmatprep.subr.mxu0 %v356
    %770 = vmatpush1.msra.mxu0 %v355
    %771 = vmatprep.subr.mxu0 %v360
    %772 = vmatpush1.msra.mxu0 %v359
    %773 = vmatprep.subr.mxu0 %v364
    %774 = vmatpush1.msra.mxu0 %v363
    %775 = vmatprep.subr.mxu0 %v368
    %776 = vmatpush1.msra.mxu0 %v367
    %777 = vmatprep.subr.mxu0 %v372
    %778 = vmatpush1.msra.mxu0 %v371
    %779 = vmatprep.subr.mxu0 %v376
    %780 = vmatpush1.msra.mxu0 %v375
    %781 = vmatprep.subr.mxu0 %v380
    %782 = vmatpush1.msra.mxu0 %v379
    %783 = vmatprep.subr.mxu0 %v384
    %784 = vmatpush1.msra.mxu0 %v383
    %785 = vmatprep.subr.mxu0 %v388
    %786 = vmatpush1.msra.mxu0 %v387
    %787 = vmatprep.subr.mxu0 %v392
    %788 = vmatpush1.msra.mxu0 %v391
    %789 = vmatprep.subr.mxu0 %v396
    %790 = vmatpush1.msra.mxu0 %v395
    %791 = vmatprep.subr.mxu0 %v400
    %792 = vmatpush1.msra.mxu0 %v399
    %793 = vmatprep.subr.mxu0 %v404
    %794 = vmatpush1.msra.mxu0 %v403
    %795 = vmatprep.subr.mxu0 %v408
    %796 = vmatpush1.msra.mxu0 %v407
    %797 = vmatprep.subr.mxu0 %v412
    %798 = vmatpush1.msra.mxu0 %v411
    %799 = vmatprep.subr.mxu0 0.0
    %800 = vmatpush1.msra.mxu0 0.0
    %801 = vmatprep.subr.mxu0 0.0
    %802 = vmatpush1.msra.mxu0 0.0
    %803 = vmatprep.subr.mxu0 0.0
    %804 = vmatpush1.msra.mxu0 0.0
    %805 = vmatprep.subr.mxu0 0.0
    %806 = vmatpush1.msra.mxu0 0.0
    %807 = vmatprep.subr.mxu0 0.0
    %808 = vmatpush1.msra.mxu0 0.0
    %809 = vmatprep.subr.mxu0 0.0
    %810 = vmatpush1.msra.mxu0 0.0
    %811 = vmatprep.subr.mxu0 0.0
    %812 = vmatpush1.msra.mxu0 0.0
    %813 = vmatprep.subr.mxu0 0.0
    %814 = vmatpush1.msra.mxu0 0.0
    %815 = vmatprep.subr.mxu0 0.0
    %816 = vmatpush1.msra.mxu0 0.0
    %817 = vmatprep.subr.mxu0 0.0
    %818 = vmatpush1.msra.mxu0 0.0
    %819 = vmatprep.subr.mxu0 0.0
    %820 = vmatpush1.msra.mxu0 0.0
    %821 = vmatprep.subr.mxu0 0.0
    %822 = vmatpush1.msra.mxu0 0.0
    %823 = vmatprep.subr.mxu0 0.0
    %824 = vmatpush1.msra.mxu0 0.0
    %825 = vmatprep.subr.mxu0 0.0
    %826 = vmatpush1.msra.mxu0 0.0
    %827 = vmatprep.subr.mxu0 0.0
    %828 = vmatpush1.msra.mxu0 0.0
    %829 = vmatprep.subr.mxu0 0.0
    %830 = vmatpush1.msra.mxu0 0.0
    %831 = vmatprep.mubr.f32.mxu0 0.0
    %832 = vmatmul.mubr.f32.gmra.mrb[0].mxu0 %v762
    %v833 = vpop.f32.mrb[0].mxu0
    %v834 = vadd.f32 0.0, %v833
    %v835 = vpop.f32.mrb[0].mxu0
    %v836 = vadd.f32 0.0, %v835
    %837 = vdwg.mxu0
    %838 = vmatprep.subr.mxu0 %v354
    %839 = vmatpush1.msra.mxu0 %v353
    %840 = vmatprep.subr.mxu0 %v358
    %841 = vmatpush1.msra.mxu0 %v357
    %842 = vmatprep.subr.mxu0 %v362
    %843 = vmatpush1.msra.mxu0 %v361
    %844 = vmatprep.subr.mxu0 %v366
    %845 = vmatpush1.msra.mxu0 %v365
    %846 = vmatprep.subr.mxu0 %v370
    %847 = vmatpush1.msra.mxu0 %v369
    %848 = vmatprep.subr.mxu0 %v374
    %849 = vmatpush1.msra.mxu0 %v373
    %850 = vmatprep.subr.mxu0 %v378
    %851 = vmatpush1.msra.mxu0 %v377
    %852 = vmatprep.subr.mxu0 %v382
    %853 = vmatpush1.msra.mxu0 %v381
    %854 = vmatprep.subr.mxu0 %v386
    %855 = vmatpush1.msra.mxu0 %v385
    %856 = vmatprep.subr.mxu0 %v390
    %857 = vmatpush1.msra.mxu0 %v389
    %858 = vmatprep.subr.mxu0 %v394
    %859 = vmatpush1.msra.mxu0 %v393
    %860 = vmatprep.subr.mxu0 %v398
    %861 = vmatpush1.msra.mxu0 %v397
    %862 = vmatprep.subr.mxu0 %v402
    %863 = vmatpush1.msra.mxu0 %v401
    %864 = vmatprep.subr.mxu0 %v406
    %865 = vmatpush1.msra.mxu0 %v405
    %866 = vmatprep.subr.mxu0 %v410
    %867 = vmatpush1.msra.mxu0 %v409
    %868 = vmatprep.subr.mxu0 %v414
    %869 = vmatpush1.msra.mxu0 %v413
    %870 = vmatprep.subr.mxu0 0.0
    %871 = vmatpush1.msra.mxu0 0.0
    %872 = vmatprep.subr.mxu0 0.0
    %873 = vmatpush1.msra.mxu0 0.0
    %874 = vmatprep.subr.mxu0 0.0
    %875 = vmatpush1.msra.mxu0 0.0
    %876 = vmatprep.subr.mxu0 0.0
    %877 = vmatpush1.msra.mxu0 0.0
    %878 = vmatprep.subr.mxu0 0.0
    %879 = vmatpush1.msra.mxu0 0.0
    %880 = vmatprep.subr.mxu0 0.0
    %881 = vmatpush1.msra.mxu0 0.0
    %882 = vmatprep.subr.mxu0 0.0
    %883 = vmatpush1.msra.mxu0 0.0
    %884 = vmatprep.subr.mxu0 0.0
    %885 = vmatpush1.msra.mxu0 0.0
    %886 = vmatprep.subr.mxu0 0.0
    %887 = vmatpush1.msra.mxu0 0.0
    %888 = vmatprep.subr.mxu0 0.0
    %889 = vmatpush1.msra.mxu0 0.0
    %890 = vmatprep.subr.mxu0 0.0
    %891 = vmatpush1.msra.mxu0 0.0
    %892 = vmatprep.subr.mxu0 0.0
    %893 = vmatpush1.msra.mxu0 0.0
    %894 = vmatprep.subr.mxu0 0.0
    %895 = vmatpush1.msra.mxu0 0.0
    %896 = vmatprep.subr.mxu0 0.0
    %897 = vmatpush1.msra.mxu0 0.0
    %898 = vmatprep.subr.mxu0 0.0
    %899 = vmatpush1.msra.mxu0 0.0
    %900 = vmatprep.subr.mxu0 0.0
    %901 = vmatpush1.msra.mxu0 0.0
    %902 = vmatprep.mubr.f32.mxu0 0.0
    %903 = vmatmul.mubr.f32.gmra.mrb[0].mxu0 %v762
    %v904 = vpop.f32.mrb[0].mxu0
    %v905 = vadd.f32 0.0, %v904
    %v906 = vpop.f32.mrb[0].mxu0
    %v907 = vadd.f32 0.0, %v906
    %908 = vdwg.mxu0
    %v909 = vadd.f32 %v763, %v834
    %v910 = vadd.f32 %v764, %v836
    %v911 = vadd.f32 %v765, %v905
    %v912 = vadd.f32 %v766, %v907
    %v913 = vxor.u32 %v909, 2147483648
    %v914 = vmul.f32 %v913, 1.442695
    %v915 = vpow.pop %v914
    %v916 = vadd.f32 %v915, 1.0
    %v917 = vrcp.pop %v916
    %v918 = vmul.f32 1.0, %v917
    %v919 = vxor.u32 %v910, 2147483648
    %v920 = vmul.f32 %v919, 1.442695
    %v921 = vpow.pop %v920
    %v922 = vadd.f32 %v921, 1.0
    %v923 = vrcp.pop %v922
    %v924 = vmul.f32 1.0, %v923
    %v925 = vtanh.pop %v911
    %v926 = vxor.u32 %v912, 2147483648
    %v927 = vmul.f32 %v926, 1.442695
    %v928 = vpow.pop %v927
    %v929 = vadd.f32 %v928, 1.0
    %v930 = vrcp.pop %v929
    %v931 = vmul.f32 1.0, %v930
    %v932 = vmul.f32 %v924, %v760
    %v933 = vmul.f32 %v918, %v925
    %v934 = vadd.f32 %v932, %v933
    %v935 = vtanh.pop %v934
    %v936 = vmul.f32 %v931, %v935
    %v937 = vld [vmem:[#allocation2 + $0x60] sm:$0xff]
    %v938 = vld [vmem:[#allocation2 + $0x68] sm:$0xff]
    %v939 = vld [vmem:[#allocation2 + $0x70] sm:$0xff]
    %v940 = vld [vmem:[#allocation2 + $0x78] sm:$0xff]
    %941 = vmatprep.subr.mxu0 %v352
    %942 = vmatpush1.msra.mxu0 %v351
    %943 = vmatprep.subr.mxu0 %v356
    %944 = vmatpush1.msra.mxu0 %v355
    %945 = vmatprep.subr.mxu0 %v360
    %946 = vmatpush1.msra.mxu0 %v359
    %947 = vmatprep.subr.mxu0 %v364
    %948 = vmatpush1.msra.mxu0 %v363
    %949 = vmatprep.subr.mxu0 %v368
    %950 = vmatpush1.msra.mxu0 %v367
    %951 = vmatprep.subr.mxu0 %v372
    %952 = vmatpush1.msra.mxu0 %v371
    %953 = vmatprep.subr.mxu0 %v376
    %954 = vmatpush1.msra.mxu0 %v375
    %955 = vmatprep.subr.mxu0 %v380
    %956 = vmatpush1.msra.mxu0 %v379
    %957 = vmatprep.subr.mxu0 %v384
    %958 = vmatpush1.msra.mxu0 %v383
    %959 = vmatprep.subr.mxu0 %v388
    %960 = vmatpush1.msra.mxu0 %v387
    %961 = vmatprep.subr.mxu0 %v392
    %962 = vmatpush1.msra.mxu0 %v391
    %963 = vmatprep.subr.mxu0 %v396
    %964 = vmatpush1.msra.mxu0 %v395
    %965 = vmatprep.subr.mxu0 %v400
    %966 = vmatpush1.msra.mxu0 %v399
    %967 = vmatprep.subr.mxu0 %v404
    %968 = vmatpush1.msra.mxu0 %v403
    %969 = vmatprep.subr.mxu0 %v408
    %970 = vmatpush1.msra.mxu0 %v407
    %971 = vmatprep.subr.mxu0 %v412
    %972 = vmatpush1.msra.mxu0 %v411
    %973 = vmatprep.subr.mxu0 0.0
    %974 = vmatpush1.msra.mxu0 0.0
    %975 = vmatprep.subr.mxu0 0.0
    %976 = vmatpush1.msra.mxu0 0.0
    %977 = vmatprep.subr.mxu0 0.0
    %978 = vmatpush1.msra.mxu0 0.0
    %979 = vmatprep.subr.mxu0 0.0
    %980 = vmatpush1.msra.mxu0 0.0
    %981 = vmatprep.subr.mxu0 0.0
    %982 = vmatpush1.msra.mxu0 0.0
    %983 = vmatprep.subr.mxu0 0.0
    %984 = vmatpush1.msra.mxu0 0.0
    %985 = vmatprep.subr.mxu0 0.0
    %986 = vmatpush1.msra.mxu0 0.0
    %987 = vmatprep.subr.mxu0 0.0
    %988 = vmatpush1.msra.mxu0 0.0
    %989 = vmatprep.subr.mxu0 0.0
    %990 = vmatpush1.msra.mxu0 0.0
    %991 = vmatprep.subr.mxu0 0.0
    %992 = vmatpush1.msra.mxu0 0.0
    %993 = vmatprep.subr.mxu0 0.0
    %994 = vmatpush1.msra.mxu0 0.0
    %995 = vmatprep.subr.mxu0 0.0
    %996 = vmatpush1.msra.mxu0 0.0
    %997 = vmatprep.subr.mxu0 0.0
    %998 = vmatpush1.msra.mxu0 0.0
    %999 = vmatprep.subr.mxu0 0.0
    %1000 = vmatpush1.msra.mxu0 0.0
    %1001 = vmatprep.subr.mxu0 0.0
    %1002 = vmatpush1.msra.mxu0 0.0
    %1003 = vmatprep.subr.mxu0 0.0
    %1004 = vmatpush1.msra.mxu0 0.0
    %1005 = vmatprep.mubr.f32.mxu0 0.0
    %1006 = vmatmul.mubr.f32.gmra.mrb[0].mxu0 %v936
    %v1007 = vpop.f32.mrb[0].mxu0
    %v1008 = vadd.f32 0.0, %v1007
    %v1009 = vpop.f32.mrb[0].mxu0
    %v1010 = vadd.f32 0.0, %v1009
    %1011 = vdwg.mxu0
    %1012 = vmatprep.subr.mxu0 %v354
    %1013 = vmatpush1.msra.mxu0 %v353
    %1014 = vmatprep.subr.mxu0 %v358
    %1015 = vmatpush1.msra.mxu0 %v357
    %1016 = vmatprep.subr.mxu0 %v362
    %1017 = vmatpush1.msra.mxu0 %v361
    %1018 = vmatprep.subr.mxu0 %v366
    %1019 = vmatpush1.msra.mxu0 %v365
    %1020 = vmatprep.subr.mxu0 %v370
    %1021 = vmatpush1.msra.mxu0 %v369
    %1022 = vmatprep.subr.mxu0 %v374
    %1023 = vmatpush1.msra.mxu0 %v373
    %1024 = vmatprep.subr.mxu0 %v378
    %1025 = vmatpush1.msra.mxu0 %v377
    %1026 = vmatprep.subr.mxu0 %v382
    %1027 = vmatpush1.msra.mxu0 %v381
    %1028 = vmatprep.subr.mxu0 %v386
    %1029 = vmatpush1.msra.mxu0 %v385
    %1030 = vmatprep.subr.mxu0 %v390
    %1031 = vmatpush1.msra.mxu0 %v389
    %1032 = vmatprep.subr.mxu0 %v394
    %1033 = vmatpush1.msra.mxu0 %v393
    %1034 = vmatprep.subr.mxu0 %v398
    %1035 = vmatpush1.msra.mxu0 %v397
    %1036 = vmatprep.subr.mxu0 %v402
    %1037 = vmatpush1.msra.mxu0 %v401
    %1038 = vmatprep.subr.mxu0 %v406
    %1039 = vmatpush1.msra.mxu0 %v405
    %1040 = vmatprep.subr.mxu0 %v410
    %1041 = vmatpush1.msra.mxu0 %v409
    %1042 = vmatprep.subr.mxu0 %v414
    %1043 = vmatpush1.msra.mxu0 %v413
    %1044 = vmatprep.subr.mxu0 0.0
    %1045 = vmatpush1.msra.mxu0 0.0
    %1046 = vmatprep.subr.mxu0 0.0
    %1047 = vmatpush1.msra.mxu0 0.0
    %1048 = vmatprep.subr.mxu0 0.0
    %1049 = vmatpush1.msra.mxu0 0.0
    %1050 = vmatprep.subr.mxu0 0.0
    %1051 = vmatpush1.msra.mxu0 0.0
    %1052 = vmatprep.subr.mxu0 0.0
    %1053 = vmatpush1.msra.mxu0 0.0
    %1054 = vmatprep.subr.mxu0 0.0
    %1055 = vmatpush1.msra.mxu0 0.0
    %1056 = vmatprep.subr.mxu0 0.0
    %1057 = vmatpush1.msra.mxu0 0.0
    %1058 = vmatprep.subr.mxu0 0.0
    %1059 = vmatpush1.msra.mxu0 0.0
    %1060 = vmatprep.subr.mxu0 0.0
    %1061 = vmatpush1.msra.mxu0 0.0
    %1062 = vmatprep.subr.mxu0 0.0
    %1063 = vmatpush1.msra.mxu0 0.0
    %1064 = vmatprep.subr.mxu0 0.0
    %1065 = vmatpush1.msra.mxu0 0.0
    %1066 = vmatprep.subr.mxu0 0.0
    %1067 = vmatpush1.msra.mxu0 0.0
    %1068 = vmatprep.subr.mxu0 0.0
    %1069 = vmatpush1.msra.mxu0 0.0
    %1070 = vmatprep.subr.mxu0 0.0
    %1071 = vmatpush1.msra.mxu0 0.0
    %1072 = vmatprep.subr.mxu0 0.0
    %1073 = vmatpush1.msra.mxu0 0.0
    %1074 = vmatprep.subr.mxu0 0.0
    %1075 = vmatpush1.msra.mxu0 0.0
    %1076 = vmatprep.mubr.f32.mxu0 0.0
    %1077 = vmatmul.mubr.f32.gmra.mrb[0].mxu0 %v936
    %v1078 = vpop.f32.mrb[0].mxu0
    %v1079 = vadd.f32 0.0, %v1078
    %v1080 = vpop.f32.mrb[0].mxu0
    %v1081 = vadd.f32 0.0, %v1080
    %1082 = vdwg.mxu0
    %v1083 = vadd.f32 %v937, %v1008
    %v1084 = vadd.f32 %v938, %v1010
    %v1085 = vadd.f32 %v939, %v1079
    %v1086 = vadd.f32 %v940, %v1081
    %v1087 = vxor.u32 %v1083, 2147483648
    %v1088 = vmul.f32 %v1087, 1.442695
    %v1089 = vpow.pop %v1088
    %v1090 = vadd.f32 %v1089, 1.0
    %v1091 = vrcp.pop %v1090
    %v1092 = vmul.f32 1.0, %v1091
    %v1093 = vxor.u32 %v1084, 2147483648
    %v1094 = vmul.f32 %v1093, 1.442695
    %v1095 = vpow.pop %v1094
    %v1096 = vadd.f32 %v1095, 1.0
    %v1097 = vrcp.pop %v1096
    %v1098 = vmul.f32 1.0, %v1097
    %v1099 = vtanh.pop %v1085
    %v1100 = vxor.u32 %v1086, 2147483648
    %v1101 = vmul.f32 %v1100, 1.442695
    %v1102 = vpow.pop %v1101
    %v1103 = vadd.f32 %v1102, 1.0
    %v1104 = vrcp.pop %v1103
    %v1105 = vmul.f32 1.0, %v1104
    %v1106 = vmul.f32 %v1098, %v934
    %v1107 = vmul.f32 %v1092, %v1099
    %v1108 = vadd.f32 %v1106, %v1107
    %v1109 = vtanh.pop %v1108
    %v1110 = vmul.f32 %v1105, %v1109
    %v1111 = vld [vmem:[#allocation2 + $0x80] sm:$0xff]
    %v1112 = vld [vmem:[#allocation2 + $0x88] sm:$0xff]
    %v1113 = vld [vmem:[#allocation2 + $0x90] sm:$0xff]
    %v1114 = vld [vmem:[#allocation2 + $0x98] sm:$0xff]
    %1115 = vmatprep.subr.mxu0 %v352
    %1116 = vmatpush1.msra.mxu0 %v351
    %1117 = vmatprep.subr.mxu0 %v356
    %1118 = vmatpush1.msra.mxu0 %v355
    %1119 = vmatprep.subr.mxu0 %v360
    %1120 = vmatpush1.msra.mxu0 %v359
    %1121 = vmatprep.subr.mxu0 %v364
    %1122 = vmatpush1.msra.mxu0 %v363
    %1123 = vmatprep.subr.mxu0 %v368
    %1124 = vmatpush1.msra.mxu0 %v367
    %1125 = vmatprep.subr.mxu0 %v372
    %1126 = vmatpush1.msra.mxu0 %v371
    %1127 = vmatprep.subr.mxu0 %v376
    %1128 = vmatpush1.msra.mxu0 %v375
    %1129 = vmatprep.subr.mxu0 %v380
    %1130 = vmatpush1.msra.mxu0 %v379
    %1131 = vmatprep.subr.mxu0 %v384
    %1132 = vmatpush1.msra.mxu0 %v383
    %1133 = vmatprep.subr.mxu0 %v388
    %1134 = vmatpush1.msra.mxu0 %v387
    %1135 = vmatprep.subr.mxu0 %v392
    %1136 = vmatpush1.msra.mxu0 %v391
    %1137 = vmatprep.subr.mxu0 %v396
    %1138 = vmatpush1.msra.mxu0 %v395
    %1139 = vmatprep.subr.mxu0 %v400
    %1140 = vmatpush1.msra.mxu0 %v399
    %1141 = vmatprep.subr.mxu0 %v404
    %1142 = vmatpush1.msra.mxu0 %v403
    %1143 = vmatprep.subr.mxu0 %v408
    %1144 = vmatpush1.msra.mxu0 %v407
    %1145 = vmatprep.subr.mxu0 %v412
    %1146 = vmatpush1.msra.mxu0 %v411
    %1147 = vmatprep.subr.mxu0 0.0
    %1148 = vmatpush1.msra.mxu0 0.0
    %1149 = vmatprep.subr.mxu0 0.0
    %1150 = vmatpush1.msra.mxu0 0.0
    %1151 = vmatprep.subr.mxu0 0.0
    %1152 = vmatpush1.msra.mxu0 0.0
    %1153 = vmatprep.subr.mxu0 0.0
    %1154 = vmatpush1.msra.mxu0 0.0
    %1155 = vmatprep.subr.mxu0 0.0
    %1156 = vmatpush1.msra.mxu0 0.0
    %1157 = vmatprep.subr.mxu0 0.0
    %1158 = vmatpush1.msra.mxu0 0.0
    %1159 = vmatprep.subr.mxu0 0.0
    %1160 = vmatpush1.msra.mxu0 0.0
    %1161 = vmatprep.subr.mxu0 0.0
    %1162 = vmatpush1.msra.mxu0 0.0
    %1163 = vmatprep.subr.mxu0 0.0
    %1164 = vmatpush1.msra.mxu0 0.0
    %1165 = vmatprep.subr.mxu0 0.0
    %1166 = vmatpush1.msra.mxu0 0.0
    %1167 = vmatprep.subr.mxu0 0.0
    %1168 = vmatpush1.msra.mxu0 0.0
    %1169 = vmatprep.subr.mxu0 0.0
    %1170 = vmatpush1.msra.mxu0 0.0
    %1171 = vmatprep.subr.mxu0 0.0
    %1172 = vmatpush1.msra.mxu0 0.0
    %1173 = vmatprep.subr.mxu0 0.0
    %1174 = vmatpush1.msra.mxu0 0.0
    %1175 = vmatprep.subr.mxu0 0.0
    %1176 = vmatpush1.msra.mxu0 0.0
    %1177 = vmatprep.subr.mxu0 0.0
    %1178 = vmatpush1.msra.mxu0 0.0
    %1179 = vmatprep.mubr.f32.mxu0 0.0
    %1180 = vmatmul.mubr.f32.gmra.mrb[0].mxu0 %v1110
    %v1181 = vpop.f32.mrb[0].mxu0
    %v1182 = vadd.f32 0.0, %v1181
    %v1183 = vpop.f32.mrb[0].mxu0
    %v1184 = vadd.f32 0.0, %v1183
    %1185 = vdwg.mxu0
    %1186 = vmatprep.subr.mxu0 %v354
    %1187 = vmatpush1.msra.mxu0 %v353
    %1188 = vmatprep.subr.mxu0 %v358
    %1189 = vmatpush1.msra.mxu0 %v357
    %1190 = vmatprep.subr.mxu0 %v362
    %1191 = vmatpush1.msra.mxu0 %v361
    %1192 = vmatprep.subr.mxu0 %v366
    %1193 = vmatpush1.msra.mxu0 %v365
    %1194 = vmatprep.subr.mxu0 %v370
    %1195 = vmatpush1.msra.mxu0 %v369
    %1196 = vmatprep.subr.mxu0 %v374
    %1197 = vmatpush1.msra.mxu0 %v373
    %1198 = vmatprep.subr.mxu0 %v378
    %1199 = vmatpush1.msra.mxu0 %v377
    %1200 = vmatprep.subr.mxu0 %v382
    %1201 = vmatpush1.msra.mxu0 %v381
    %1202 = vmatprep.subr.mxu0 %v386
    %1203 = vmatpush1.msra.mxu0 %v385
    %1204 = vmatprep.subr.mxu0 %v390
    %1205 = vmatpush1.msra.mxu0 %v389
    %1206 = vmatprep.subr.mxu0 %v394
    %1207 = vmatpush1.msra.mxu0 %v393
    %1208 = vmatprep.subr.mxu0 %v398
    %1209 = vmatpush1.msra.mxu0 %v397
    %1210 = vmatprep.subr.mxu0 %v402
    %1211 = vmatpush1.msra.mxu0 %v401
    %1212 = vmatprep.subr.mxu0 %v406
    %1213 = vmatpush1.msra.mxu0 %v405
    %1214 = vmatprep.subr.mxu0 %v410
    %1215 = vmatpush1.msra.mxu0 %v409
    %1216 = vmatprep.subr.mxu0 %v414
    %1217 = vmatpush1.msra.mxu0 %v413
    %1218 = vmatprep.subr.mxu0 0.0
    %1219 = vmatpush1.msra.mxu0 0.0
    %1220 = vmatprep.subr.mxu0 0.0
    %1221 = vmatpush1.msra.mxu0 0.0
    %1222 = vmatprep.subr.mxu0 0.0
    %1223 = vmatpush1.msra.mxu0 0.0
    %1224 = vmatprep.subr.mxu0 0.0
    %1225 = vmatpush1.msra.mxu0 0.0
    %1226 = vmatprep.subr.mxu0 0.0
    %1227 = vmatpush1.msra.mxu0 0.0
    %1228 = vmatprep.subr.mxu0 0.0
    %1229 = vmatpush1.msra.mxu0 0.0
    %1230 = vmatprep.subr.mxu0 0.0
    %1231 = vmatpush1.msra.mxu0 0.0
    %1232 = vmatprep.subr.mxu0 0.0
    %1233 = vmatpush1.msra.mxu0 0.0
    %1234 = vmatprep.subr.mxu0 0.0
    %1235 = vmatpush1.msra.mxu0 0.0
    %1236 = vmatprep.subr.mxu0 0.0
    %1237 = vmatpush1.msra.mxu0 0.0
    %1238 = vmatprep.subr.mxu0 0.0
    %1239 = vmatpush1.msra.mxu0 0.0
    %1240 = vmatprep.subr.mxu0 0.0
    %1241 = vmatpush1.msra.mxu0 0.0
    %1242 = vmatprep.subr.mxu0 0.0
    %1243 = vmatpush1.msra.mxu0 0.0
    %1244 = vmatprep.subr.mxu0 0.0
    %1245 = vmatpush1.msra.mxu0 0.0
    %1246 = vmatprep.subr.mxu0 0.0
    %1247 = vmatpush1.msra.mxu0 0.0
    %1248 = vmatprep.subr.mxu0 0.0
    %1249 = vmatpush1.msra.mxu0 0.0
    %1250 = vmatprep.mubr.f32.mxu0 0.0
    %1251 = vmatmul.mubr.f32.gmra.mrb[0].mxu0 %v1110
    %v1252 = vpop.f32.mrb[0].mxu0
    %v1253 = vadd.f32 0.0, %v1252
    %v1254 = vpop.f32.mrb[0].mxu0
    %v1255 = vadd.f32 0.0, %v1254
    %1256 = vdwg.mxu0
    %v1257 = vadd.f32 %v1111, %v1182
    %v1258 = vadd.f32 %v1112, %v1184
    %v1259 = vadd.f32 %v1113, %v1253
    %v1260 = vadd.f32 %v1114, %v1255
    %v1261 = vxor.u32 %v1257, 2147483648
    %v1262 = vmul.f32 %v1261, 1.442695
    %v1263 = vpow.pop %v1262
    %v1264 = vadd.f32 %v1263, 1.0
    %v1265 = vrcp.pop %v1264
    %v1266 = vmul.f32 1.0, %v1265
    %v1267 = vxor.u32 %v1258, 2147483648
    %v1268 = vmul.f32 %v1267, 1.442695
    %v1269 = vpow.pop %v1268
    %v1270 = vadd.f32 %v1269, 1.0
    %v1271 = vrcp.pop %v1270
    %v1272 = vmul.f32 1.0, %v1271
    %v1273 = vtanh.pop %v1259
    %v1274 = vxor.u32 %v1260, 2147483648
    %v1275 = vmul.f32 %v1274, 1.442695
    %v1276 = vpow.pop %v1275
    %v1277 = vadd.f32 %v1276, 1.0
    %v1278 = vrcp.pop %v1277
    %v1279 = vmul.f32 1.0, %v1278
    %v1280 = vmul.f32 %v1272, %v1108
    %v1281 = vmul.f32 %v1266, %v1273
    %v1282 = vadd.f32 %v1280, %v1281
    %v1283 = vtanh.pop %v1282
    %v1284 = vmul.f32 %v1279, %v1283
    %v1285 = vld [vmem:[#allocation2 + $0xa0] sm:$0xff]
    %v1286 = vld [vmem:[#allocation2 + $0xa8] sm:$0xff]
    %v1287 = vld [vmem:[#allocation2 + $0xb0] sm:$0xff]
    %v1288 = vld [vmem:[#allocation2 + $0xb8] sm:$0xff]
    %1289 = vmatprep.subr.mxu0 %v352
    %1290 = vmatpush1.msra.mxu0 %v351
    %1291 = vmatprep.subr.mxu0 %v356
    %1292 = vmatpush1.msra.mxu0 %v355
    %1293 = vmatprep.subr.mxu0 %v360
    %1294 = vmatpush1.msra.mxu0 %v359
    %1295 = vmatprep.subr.mxu0 %v364
    %1296 = vmatpush1.msra.mxu0 %v363
    %1297 = vmatprep.subr.mxu0 %v368
    %1298 = vmatpush1.msra.mxu0 %v367
    %1299 = vmatprep.subr.mxu0 %v372
    %1300 = vmatpush1.msra.mxu0 %v371
    %1301 = vmatprep.subr.mxu0 %v376
    %1302 = vmatpush1.msra.mxu0 %v375
    %1303 = vmatprep.subr.mxu0 %v380
    %1304 = vmatpush1.msra.mxu0 %v379
    %1305 = vmatprep.subr.mxu0 %v384
    %1306 = vmatpush1.msra.mxu0 %v383
    %1307 = vmatprep.subr.mxu0 %v388
    %1308 = vmatpush1.msra.mxu0 %v387
    %1309 = vmatprep.subr.mxu0 %v392
    %1310 = vmatpush1.msra.mxu0 %v391
    %1311 = vmatprep.subr.mxu0 %v396
    %1312 = vmatpush1.msra.mxu0 %v395
    %1313 = vmatprep.subr.mxu0 %v400
    %1314 = vmatpush1.msra.mxu0 %v399
    %1315 = vmatprep.subr.mxu0 %v404
    %1316 = vmatpush1.msra.mxu0 %v403
    %1317 = vmatprep.subr.mxu0 %v408
    %1318 = vmatpush1.msra.mxu0 %v407
    %1319 = vmatprep.subr.mxu0 %v412
    %1320 = vmatpush1.msra.mxu0 %v411
    %1321 = vmatprep.subr.mxu0 0.0
    %1322 = vmatpush1.msra.mxu0 0.0
    %1323 = vmatprep.subr.mxu0 0.0
    %1324 = vmatpush1.msra.mxu0 0.0
    %1325 = vmatprep.subr.mxu0 0.0
    %1326 = vmatpush1.msra.mxu0 0.0
    %1327 = vmatprep.subr.mxu0 0.0
    %1328 = vmatpush1.msra.mxu0 0.0
    %1329 = vmatprep.subr.mxu0 0.0
    %1330 = vmatpush1.msra.mxu0 0.0
    %1331 = vmatprep.subr.mxu0 0.0
    %1332 = vmatpush1.msra.mxu0 0.0
    %1333 = vmatprep.subr.mxu0 0.0
    %1334 = vmatpush1.msra.mxu0 0.0
    %1335 = vmatprep.subr.mxu0 0.0
    %1336 = vmatpush1.msra.mxu0 0.0
    %1337 = vmatprep.subr.mxu0 0.0
    %1338 = vmatpush1.msra.mxu0 0.0
    %1339 = vmatprep.subr.mxu0 0.0
    %1340 = vmatpush1.msra.mxu0 0.0
    %1341 = vmatprep.subr.mxu0 0.0
    %1342 = vmatpush1.msra.mxu0 0.0
    %1343 = vmatprep.subr.mxu0 0.0
    %1344 = vmatpush1.msra.mxu0 0.0
    %1345 = vmatprep.subr.mxu0 0.0
    %1346 = vmatpush1.msra.mxu0 0.0
    %1347 = vmatprep.subr.mxu0 0.0
    %1348 = vmatpush1.msra.mxu0 0.0
    %1349 = vmatprep.subr.mxu0 0.0
    %1350 = vmatpush1.msra.mxu0 0.0
    %1351 = vmatprep.subr.mxu0 0.0
    %1352 = vmatpush1.msra.mxu0 0.0
    %1353 = vmatprep.mubr.f32.mxu0 0.0
    %1354 = vmatmul.mubr.f32.gmra.mrb[0].mxu0 %v1284
    %v1355 = vpop.f32.mrb[0].mxu0
    %v1356 = vadd.f32 0.0, %v1355
    %v1357 = vpop.f32.mrb[0].mxu0
    %v1358 = vadd.f32 0.0, %v1357
    %1359 = vdwg.mxu0
    %1360 = vmatprep.subr.mxu0 %v354
    %1361 = vmatpush1.msra.mxu0 %v353
    %1362 = vmatprep.subr.mxu0 %v358
    %1363 = vmatpush1.msra.mxu0 %v357
    %1364 = vmatprep.subr.mxu0 %v362
    %1365 = vmatpush1.msra.mxu0 %v361
    %1366 = vmatprep.subr.mxu0 %v366
    %1367 = vmatpush1.msra.mxu0 %v365
    %1368 = vmatprep.subr.mxu0 %v370
    %1369 = vmatpush1.msra.mxu0 %v369
    %1370 = vmatprep.subr.mxu0 %v374
    %1371 = vmatpush1.msra.mxu0 %v373
    %1372 = vmatprep.subr.mxu0 %v378
    %1373 = vmatpush1.msra.mxu0 %v377
    %1374 = vmatprep.subr.mxu0 %v382
    %1375 = vmatpush1.msra.mxu0 %v381
    %1376 = vmatprep.subr.mxu0 %v386
    %1377 = vmatpush1.msra.mxu0 %v385
    %1378 = vmatprep.subr.mxu0 %v390
    %1379 = vmatpush1.msra.mxu0 %v389
    %1380 = vmatprep.subr.mxu0 %v394
    %1381 = vmatpush1.msra.mxu0 %v393
    %1382 = vmatprep.subr.mxu0 %v398
    %1383 = vmatpush1.msra.mxu0 %v397
    %1384 = vmatprep.subr.mxu0 %v402
    %1385 = vmatpush1.msra.mxu0 %v401
    %1386 = vmatprep.subr.mxu0 %v406
    %1387 = vmatpush1.msra.mxu0 %v405
    %1388 = vmatprep.subr.mxu0 %v410
    %1389 = vmatpush1.msra.mxu0 %v409
    %1390 = vmatprep.subr.mxu0 %v414
    %1391 = vmatpush1.msra.mxu0 %v413
    %1392 = vmatprep.subr.mxu0 0.0
    %1393 = vmatpush1.msra.mxu0 0.0
    %1394 = vmatprep.subr.mxu0 0.0
    %1395 = vmatpush1.msra.mxu0 0.0
    %1396 = vmatprep.subr.mxu0 0.0
    %1397 = vmatpush1.msra.mxu0 0.0
    %1398 = vmatprep.subr.mxu0 0.0
    %1399 = vmatpush1.msra.mxu0 0.0
    %1400 = vmatprep.subr.mxu0 0.0
    %1401 = vmatpush1.msra.mxu0 0.0
    %1402 = vmatprep.subr.mxu0 0.0
    %1403 = vmatpush1.msra.mxu0 0.0
    %1404 = vmatprep.subr.mxu0 0.0
    %1405 = vmatpush1.msra.mxu0 0.0
    %1406 = vmatprep.subr.mxu0 0.0
    %1407 = vmatpush1.msra.mxu0 0.0
    %1408 = vmatprep.subr.mxu0 0.0
    %1409 = vmatpush1.msra.mxu0 0.0
    %1410 = vmatprep.subr.mxu0 0.0
    %1411 = vmatpush1.msra.mxu0 0.0
    %1412 = vmatprep.subr.mxu0 0.0
    %1413 = vmatpush1.msra.mxu0 0.0
    %1414 = vmatprep.subr.mxu0 0.0
    %1415 = vmatpush1.msra.mxu0 0.0
    %1416 = vmatprep.subr.mxu0 0.0
    %1417 = vmatpush1.msra.mxu0 0.0
    %1418 = vmatprep.subr.mxu0 0.0
    %1419 = vmatpush1.msra.mxu0 0.0
    %1420 = vmatprep.subr.mxu0 0.0
    %1421 = vmatpush1.msra.mxu0 0.0
    %1422 = vmatprep.subr.mxu0 0.0
    %1423 = vmatpush1.msra.mxu0 0.0
    %1424 = vmatprep.mubr.f32.mxu0 0.0
    %1425 = vmatmul.mubr.f32.gmra.mrb[0].mxu0 %v1284
    %v1426 = vpop.f32.mrb[0].mxu0
    %v1427 = vadd.f32 0.0, %v1426
    %v1428 = vpop.f32.mrb[0].mxu0
    %v1429 = vadd.f32 0.0, %v1428
    %1430 = vdwg.mxu0
    %v1431 = vadd.f32 %v1285, %v1356
    %v1432 = vadd.f32 %v1286, %v1358
    %v1433 = vadd.f32 %v1287, %v1427
    %v1434 = vadd.f32 %v1288, %v1429
    %v1435 = vxor.u32 %v1431, 2147483648
    %v1436 = vmul.f32 %v1435, 1.442695
    %v1437 = vpow.pop %v1436
    %v1438 = vadd.f32 %v1437, 1.0
    %v1439 = vrcp.pop %v1438
    %v1440 = vmul.f32 1.0, %v1439
    %v1441 = vxor.u32 %v1432, 2147483648
    %v1442 = vmul.f32 %v1441, 1.442695
    %v1443 = vpow.pop %v1442
    %v1444 = vadd.f32 %v1443, 1.0
    %v1445 = vrcp.pop %v1444
    %v1446 = vmul.f32 1.0, %v1445
    %v1447 = vtanh.pop %v1433
    %v1448 = vxor.u32 %v1434, 2147483648
    %v1449 = vmul.f32 %v1448, 1.442695
    %v1450 = vpow.pop %v1449
    %v1451 = vadd.f32 %v1450, 1.0
    %v1452 = vrcp.pop %v1451
    %v1453 = vmul.f32 1.0, %v1452
    %v1454 = vmul.f32 %v1446, %v1282
    %v1455 = vmul.f32 %v1440, %v1447
    %v1456 = vadd.f32 %v1454, %v1455
    %v1457 = vtanh.pop %v1456
    %v1458 = vmul.f32 %v1453, %v1457
    %v1459 = vld [vmem:[#allocation2 + $0xc0] sm:$0xff]
    %v1460 = vld [vmem:[#allocation2 + $0xc8] sm:$0xff]
    %v1461 = vld [vmem:[#allocation2 + $0xd0] sm:$0xff]
    %v1462 = vld [vmem:[#allocation2 + $0xd8] sm:$0xff]
    %1463 = vmatprep.subr.mxu0 %v352
    %1464 = vmatpush1.msra.mxu0 %v351
    %1465 = vmatprep.subr.mxu0 %v356
    %1466 = vmatpush1.msra.mxu0 %v355
    %1467 = vmatprep.subr.mxu0 %v360
    %1468 = vmatpush1.msra.mxu0 %v359
    %1469 = vmatprep.subr.mxu0 %v364
    %1470 = vmatpush1.msra.mxu0 %v363
    %1471 = vmatprep.subr.mxu0 %v368
    %1472 = vmatpush1.msra.mxu0 %v367
    %1473 = vmatprep.subr.mxu0 %v372
    %1474 = vmatpush1.msra.mxu0 %v371
    %1475 = vmatprep.subr.mxu0 %v376
    %1476 = vmatpush1.msra.mxu0 %v375
    %1477 = vmatprep.subr.mxu0 %v380
    %1478 = vmatpush1.msra.mxu0 %v379
    %1479 = vmatprep.subr.mxu0 %v384
    %1480 = vmatpush1.msra.mxu0 %v383
    %1481 = vmatprep.subr.mxu0 %v388
    %1482 = vmatpush1.msra.mxu0 %v387
    %1483 = vmatprep.subr.mxu0 %v392
    %1484 = vmatpush1.msra.mxu0 %v391
    %1485 = vmatprep.subr.mxu0 %v396
    %1486 = vmatpush1.msra.mxu0 %v395
    %1487 = vmatprep.subr.mxu0 %v400
    %1488 = vmatpush1.msra.mxu0 %v399
    %1489 = vmatprep.subr.mxu0 %v404
    %1490 = vmatpush1.msra.mxu0 %v403
    %1491 = vmatprep.subr.mxu0 %v408
    %1492 = vmatpush1.msra.mxu0 %v407
    %1493 = vmatprep.subr.mxu0 %v412
    %1494 = vmatpush1.msra.mxu0 %v411
    %1495 = vmatprep.subr.mxu0 0.0
    %1496 = vmatpush1.msra.mxu0 0.0
    %1497 = vmatprep.subr.mxu0 0.0
    %1498 = vmatpush1.msra.mxu0 0.0
    %1499 = vmatprep.subr.mxu0 0.0
    %1500 = vmatpush1.msra.mxu0 0.0
    %1501 = vmatprep.subr.mxu0 0.0
    %1502 = vmatpush1.msra.mxu0 0.0
    %1503 = vmatprep.subr.mxu0 0.0
    %1504 = vmatpush1.msra.mxu0 0.0
    %1505 = vmatprep.subr.mxu0 0.0
    %1506 = vmatpush1.msra.mxu0 0.0
    %1507 = vmatprep.subr.mxu0 0.0
    %1508 = vmatpush1.msra.mxu0 0.0
    %1509 = vmatprep.subr.mxu0 0.0
    %1510 = vmatpush1.msra.mxu0 0.0
    %1511 = vmatprep.subr.mxu0 0.0
    %1512 = vmatpush1.msra.mxu0 0.0
    %1513 = vmatprep.subr.mxu0 0.0
    %1514 = vmatpush1.msra.mxu0 0.0
    %1515 = vmatprep.subr.mxu0 0.0
    %1516 = vmatpush1.msra.mxu0 0.0
    %1517 = vmatprep.subr.mxu0 0.0
    %1518 = vmatpush1.msra.mxu0 0.0
    %1519 = vmatprep.subr.mxu0 0.0
    %1520 = vmatpush1.msra.mxu0 0.0
    %1521 = vmatprep.subr.mxu0 0.0
    %1522 = vmatpush1.msra.mxu0 0.0
    %1523 = vmatprep.subr.mxu0 0.0
    %1524 = vmatpush1.msra.mxu0 0.0
    %1525 = vmatprep.subr.mxu0 0.0
    %1526 = vmatpush1.msra.mxu0 0.0
    %1527 = vmatprep.mubr.f32.mxu0 0.0
    %1528 = vmatmul.mubr.f32.gmra.mrb[0].mxu0 %v1458
    %v1529 = vpop.f32.mrb[0].mxu0
    %v1530 = vadd.f32 0.0, %v1529
    %v1531 = vpop.f32.mrb[0].mxu0
    %v1532 = vadd.f32 0.0, %v1531
    %1533 = vdwg.mxu0
    %1534 = vmatprep.subr.mxu0 %v354
    %1535 = vmatpush1.msra.mxu0 %v353
    %1536 = vmatprep.subr.mxu0 %v358
    %1537 = vmatpush1.msra.mxu0 %v357
    %1538 = vmatprep.subr.mxu0 %v362
    %1539 = vmatpush1.msra.mxu0 %v361
    %1540 = vmatprep.subr.mxu0 %v366
    %1541 = vmatpush1.msra.mxu0 %v365
    %1542 = vmatprep.subr.mxu0 %v370
    %1543 = vmatpush1.msra.mxu0 %v369
    %1544 = vmatprep.subr.mxu0 %v374
    %1545 = vmatpush1.msra.mxu0 %v373
    %1546 = vmatprep.subr.mxu0 %v378
    %1547 = vmatpush1.msra.mxu0 %v377
    %1548 = vmatprep.subr.mxu0 %v382
    %1549 = vmatpush1.msra.mxu0 %v381
    %1550 = vmatprep.subr.mxu0 %v386
    %1551 = vmatpush1.msra.mxu0 %v385
    %1552 = vmatprep.subr.mxu0 %v390
    %1553 = vmatpush1.msra.mxu0 %v389
    %1554 = vmatprep.subr.mxu0 %v394
    %1555 = vmatpush1.msra.mxu0 %v393
    %1556 = vmatprep.subr.mxu0 %v398
    %1557 = vmatpush1.msra.mxu0 %v397
    %1558 = vmatprep.subr.mxu0 %v402
    %1559 = vmatpush1.msra.mxu0 %v401
    %1560 = vmatprep.subr.mxu0 %v406
    %1561 = vmatpush1.msra.mxu0 %v405
    %1562 = vmatprep.subr.mxu0 %v410
    %1563 = vmatpush1.msra.mxu0 %v409
    %1564 = vmatprep.subr.mxu0 %v414
    %1565 = vmatpush1.msra.mxu0 %v413
    %1566 = vmatprep.subr.mxu0 0.0
    %1567 = vmatpush1.msra.mxu0 0.0
    %1568 = vmatprep.subr.mxu0 0.0
    %1569 = vmatpush1.msra.mxu0 0.0
    %1570 = vmatprep.subr.mxu0 0.0
    %1571 = vmatpush1.msra.mxu0 0.0
    %1572 = vmatprep.subr.mxu0 0.0
    %1573 = vmatpush1.msra.mxu0 0.0
    %1574 = vmatprep.subr.mxu0 0.0
    %1575 = vmatpush1.msra.mxu0 0.0
    %1576 = vmatprep.subr.mxu0 0.0
    %1577 = vmatpush1.msra.mxu0 0.0
    %1578 = vmatprep.subr.mxu0 0.0
    %1579 = vmatpush1.msra.mxu0 0.0
    %1580 = vmatprep.subr.mxu0 0.0
    %1581 = vmatpush1.msra.mxu0 0.0
    %1582 = vmatprep.subr.mxu0 0.0
    %1583 = vmatpush1.msra.mxu0 0.0
    %1584 = vmatprep.subr.mxu0 0.0
    %1585 = vmatpush1.msra.mxu0 0.0
    %1586 = vmatprep.subr.mxu0 0.0
    %1587 = vmatpush1.msra.mxu0 0.0
    %1588 = vmatprep.subr.mxu0 0.0
    %1589 = vmatpush1.msra.mxu0 0.0
    %1590 = vmatprep.subr.mxu0 0.0
    %1591 = vmatpush1.msra.mxu0 0.0
    %1592 = vmatprep.subr.mxu0 0.0
    %1593 = vmatpush1.msra.mxu0 0.0
    %1594 = vmatprep.subr.mxu0 0.0
    %1595 = vmatpush1.msra.mxu0 0.0
    %1596 = vmatprep.subr.mxu0 0.0
    %1597 = vmatpush1.msra.mxu0 0.0
    %1598 = vmatprep.mubr.f32.mxu0 0.0
    %1599 = vmatmul.mubr.f32.gmra.mrb[0].mxu0 %v1458
    %v1600 = vpop.f32.mrb[0].mxu0
    %v1601 = vadd.f32 0.0, %v1600
    %v1602 = vpop.f32.mrb[0].mxu0
    %v1603 = vadd.f32 0.0, %v1602
    %1604 = vdwg.mxu0
    %v1605 = vadd.f32 %v1459, %v1530
    %v1606 = vadd.f32 %v1460, %v1532
    %v1607 = vadd.f32 %v1461, %v1601
    %v1608 = vadd.f32 %v1462, %v1603
    %v1609 = vxor.u32 %v1605, 2147483648
    %v1610 = vmul.f32 %v1609, 1.442695
    %v1611 = vpow.pop %v1610
    %v1612 = vadd.f32 %v1611, 1.0
    %v1613 = vrcp.pop %v1612
    %v1614 = vmul.f32 1.0, %v1613
    %v1615 = vxor.u32 %v1606, 2147483648
    %v1616 = vmul.f32 %v1615, 1.442695
    %v1617 = vpow.pop %v1616
    %v1618 = vadd.f32 %v1617, 1.0
    %v1619 = vrcp.pop %v1618
    %v1620 = vmul.f32 1.0, %v1619
    %v1621 = vtanh.pop %v1607
    %v1622 = vxor.u32 %v1608, 2147483648
    %v1623 = vmul.f32 %v1622, 1.442695
    %v1624 = vpow.pop %v1623
    %v1625 = vadd.f32 %v1624, 1.0
    %v1626 = vrcp.pop %v1625
    %v1627 = vmul.f32 1.0, %v1626
    %v1628 = vmul.f32 %v1620, %v1456
    %v1629 = vmul.f32 %v1614, %v1621
    %v1630 = vadd.f32 %v1628, %v1629
    %v1631 = vtanh.pop %v1630
    %v1632 = vmul.f32 %v1627, %v1631
    %v1633 = vld [vmem:[#allocation2 + $0xe0] sm:$0xff]
    %v1634 = vld [vmem:[#allocation2 + $0xe8] sm:$0xff]
    %v1635 = vld [vmem:[#allocation2 + $0xf0] sm:$0xff]
    %v1636 = vld [vmem:[#allocation2 + $0xf8] sm:$0xff]
    %1637 = vmatprep.subr.mxu0 %v352
    %1638 = vmatpush1.msra.mxu0 %v351
    %1639 = vmatprep.subr.mxu0 %v356
    %1640 = vmatpush1.msra.mxu0 %v355
    %1641 = vmatprep.subr.mxu0 %v360
    %1642 = vmatpush1.msra.mxu0 %v359
    %1643 = vmatprep.subr.mxu0 %v364
    %1644 = vmatpush1.msra.mxu0 %v363
    %1645 = vmatprep.subr.mxu0 %v368
    %1646 = vmatpush1.msra.mxu0 %v367
    %1647 = vmatprep.subr.mxu0 %v372
    %1648 = vmatpush1.msra.mxu0 %v371
    %1649 = vmatprep.subr.mxu0 %v376
    %1650 = vmatpush1.msra.mxu0 %v375
    %1651 = vmatprep.subr.mxu0 %v380
    %1652 = vmatpush1.msra.mxu0 %v379
    %1653 = vmatprep.subr.mxu0 %v384
    %1654 = vmatpush1.msra.mxu0 %v383
    %1655 = vmatprep.subr.mxu0 %v388
    %1656 = vmatpush1.msra.mxu0 %v387
    %1657 = vmatprep.subr.mxu0 %v392
    %1658 = vmatpush1.msra.mxu0 %v391
    %1659 = vmatprep.subr.mxu0 %v396
    %1660 = vmatpush1.msra.mxu0 %v395
    %1661 = vmatprep.subr.mxu0 %v400
    %1662 = vmatpush1.msra.mxu0 %v399
    %1663 = vmatprep.subr.mxu0 %v404
    %1664 = vmatpush1.msra.mxu0 %v403
    %1665 = vmatprep.subr.mxu0 %v408
    %1666 = vmatpush1.msra.mxu0 %v407
    %1667 = vmatprep.subr.mxu0 %v412
    %1668 = vmatpush1.msra.mxu0 %v411
    %1669 = vmatprep.subr.mxu0 0.0
    %1670 = vmatpush1.msra.mxu0 0.0
    %1671 = vmatprep.subr.mxu0 0.0
    %1672 = vmatpush1.msra.mxu0 0.0
    %1673 = vmatprep.subr.mxu0 0.0
    %1674 = vmatpush1.msra.mxu0 0.0
    %1675 = vmatprep.subr.mxu0 0.0
    %1676 = vmatpush1.msra.mxu0 0.0
    %1677 = vmatprep.subr.mxu0 0.0
    %1678 = vmatpush1.msra.mxu0 0.0
    %1679 = vmatprep.subr.mxu0 0.0
    %1680 = vmatpush1.msra.mxu0 0.0
    %1681 = vmatprep.subr.mxu0 0.0
    %1682 = vmatpush1.msra.mxu0 0.0
    %1683 = vmatprep.subr.mxu0 0.0
    %1684 = vmatpush1.msra.mxu0 0.0
    %1685 = vmatprep.subr.mxu0 0.0
    %1686 = vmatpush1.msra.mxu0 0.0
    %1687 = vmatprep.subr.mxu0 0.0
    %1688 = vmatpush1.msra.mxu0 0.0
    %1689 = vmatprep.subr.mxu0 0.0
    %1690 = vmatpush1.msra.mxu0 0.0
    %1691 = vmatprep.subr.mxu0 0.0
    %1692 = vmatpush1.msra.mxu0 0.0
    %1693 = vmatprep.subr.mxu0 0.0
    %1694 = vmatpush1.msra.mxu0 0.0
    %1695 = vmatprep.subr.mxu0 0.0
    %1696 = vmatpush1.msra.mxu0 0.0
    %1697 = vmatprep.subr.mxu0 0.0
    %1698 = vmatpush1.msra.mxu0 0.0
    %1699 = vmatprep.subr.mxu0 0.0
    %1700 = vmatpush1.msra.mxu0 0.0
    %1701 = vmatprep.mubr.f32.mxu0 0.0
    %1702 = vmatmul.mubr.f32.gmra.mrb[0].mxu0 %v1632
    %v1703 = vpop.f32.mrb[0].mxu0
    %v1704 = vadd.f32 0.0, %v1703
    %v1705 = vpop.f32.mrb[0].mxu0
    %v1706 = vadd.f32 0.0, %v1705
    %1707 = vdwg.mxu0
    %1708 = vmatprep.subr.mxu0 %v354
    %1709 = vmatpush1.msra.mxu0 %v353
    %1710 = vmatprep.subr.mxu0 %v358
    %1711 = vmatpush1.msra.mxu0 %v357
    %1712 = vmatprep.subr.mxu0 %v362
    %1713 = vmatpush1.msra.mxu0 %v361
    %1714 = vmatprep.subr.mxu0 %v366
    %1715 = vmatpush1.msra.mxu0 %v365
    %1716 = vmatprep.subr.mxu0 %v370
    %1717 = vmatpush1.msra.mxu0 %v369
    %1718 = vmatprep.subr.mxu0 %v374
    %1719 = vmatpush1.msra.mxu0 %v373
    %1720 = vmatprep.subr.mxu0 %v378
    %1721 = vmatpush1.msra.mxu0 %v377
    %1722 = vmatprep.subr.mxu0 %v382
    %1723 = vmatpush1.msra.mxu0 %v381
    %1724 = vmatprep.subr.mxu0 %v386
    %1725 = vmatpush1.msra.mxu0 %v385
    %1726 = vmatprep.subr.mxu0 %v390
    %1727 = vmatpush1.msra.mxu0 %v389
    %1728 = vmatprep.subr.mxu0 %v394
    %1729 = vmatpush1.msra.mxu0 %v393
    %1730 = vmatprep.subr.mxu0 %v398
    %1731 = vmatpush1.msra.mxu0 %v397
    %1732 = vmatprep.subr.mxu0 %v402
    %1733 = vmatpush1.msra.mxu0 %v401
    %1734 = vmatprep.subr.mxu0 %v406
    %1735 = vmatpush1.msra.mxu0 %v405
    %1736 = vmatprep.subr.mxu0 %v410
    %1737 = vmatpush1.msra.mxu0 %v409
    %1738 = vmatprep.subr.mxu0 %v414
    %1739 = vmatpush1.msra.mxu0 %v413
    %1740 = vmatprep.subr.mxu0 0.0
    %1741 = vmatpush1.msra.mxu0 0.0
    %1742 = vmatprep.subr.mxu0 0.0
    %1743 = vmatpush1.msra.mxu0 0.0
    %1744 = vmatprep.subr.mxu0 0.0
    %1745 = vmatpush1.msra.mxu0 0.0
    %1746 = vmatprep.subr.mxu0 0.0
    %1747 = vmatpush1.msra.mxu0 0.0
    %1748 = vmatprep.subr.mxu0 0.0
    %1749 = vmatpush1.msra.mxu0 0.0
    %1750 = vmatprep.subr.mxu0 0.0
    %1751 = vmatpush1.msra.mxu0 0.0
    %1752 = vmatprep.subr.mxu0 0.0
    %1753 = vmatpush1.msra.mxu0 0.0
    %1754 = vmatprep.subr.mxu0 0.0
    %1755 = vmatpush1.msra.mxu0 0.0
    %1756 = vmatprep.subr.mxu0 0.0
    %1757 = vmatpush1.msra.mxu0 0.0
    %1758 = vmatprep.subr.mxu0 0.0
    %1759 = vmatpush1.msra.mxu0 0.0
    %1760 = vmatprep.subr.mxu0 0.0
    %1761 = vmatpush1.msra.mxu0 0.0
    %1762 = vmatprep.subr.mxu0 0.0
    %1763 = vmatpush1.msra.mxu0 0.0
    %1764 = vmatprep.subr.mxu0 0.0
    %1765 = vmatpush1.msra.mxu0 0.0
    %1766 = vmatprep.subr.mxu0 0.0
    %1767 = vmatpush1.msra.mxu0 0.0
    %1768 = vmatprep.subr.mxu0 0.0
    %1769 = vmatpush1.msra.mxu0 0.0
    %1770 = vmatprep.subr.mxu0 0.0
    %1771 = vmatpush1.msra.mxu0 0.0
    %1772 = vmatprep.mubr.f32.mxu0 0.0
    %1773 = vmatmul.mubr.f32.gmra.mrb[0].mxu0 %v1632
    %v1774 = vpop.f32.mrb[0].mxu0
    %v1775 = vadd.f32 0.0, %v1774
    %v1776 = vpop.f32.mrb[0].mxu0
    %v1777 = vadd.f32 0.0, %v1776
    %1778 = vdwg.mxu0
    %v1779 = vadd.f32 %v1633, %v1704
    %v1780 = vadd.f32 %v1634, %v1706
    %v1781 = vadd.f32 %v1635, %v1775
    %v1782 = vadd.f32 %v1636, %v1777
    %v1783 = vxor.u32 %v1779, 2147483648
    %v1784 = vmul.f32 %v1783, 1.442695
    %v1785 = vpow.pop %v1784
    %v1786 = vadd.f32 %v1785, 1.0
    %v1787 = vrcp.pop %v1786
    %v1788 = vmul.f32 1.0, %v1787
    %v1789 = vxor.u32 %v1780, 2147483648
    %v1790 = vmul.f32 %v1789, 1.442695
    %v1791 = vpow.pop %v1790
    %v1792 = vadd.f32 %v1791, 1.0
    %v1793 = vrcp.pop %v1792
    %v1794 = vmul.f32 1.0, %v1793
    %v1795 = vtanh.pop %v1781
    %v1796 = vxor.u32 %v1782, 2147483648
    %v1797 = vmul.f32 %v1796, 1.442695
    %v1798 = vpow.pop %v1797
    %v1799 = vadd.f32 %v1798, 1.0
    %v1800 = vrcp.pop %v1799
    %v1801 = vmul.f32 1.0, %v1800
    %v1802 = vmul.f32 %v1794, %v1630
    %v1803 = vmul.f32 %v1788, %v1795
    %v1804 = vadd.f32 %v1802, %v1803
    %v1805 = vtanh.pop %v1804
    %v1806 = vmul.f32 %v1801, %v1805
    %v1807 = vld [vmem:[#allocation5] sm:$0xff]
    %v1808 = vld [vmem:[#allocation5 + $0x8] sm:$0xff]
    %v1809 = vld [vmem:[#allocation5 + $0x10] sm:$0xff]
    %v1810 = vld [vmem:[#allocation5 + $0x18] sm:$0xff]
    %v1811 = vld [vmem:[#allocation5 + $0x20] sm:$0xff]
    %v1812 = vld [vmem:[#allocation5 + $0x28] sm:$0xff]
    %v1813 = vld [vmem:[#allocation5 + $0x30] sm:$0xff]
    %v1814 = vld [vmem:[#allocation5 + $0x38] sm:$0xff]
    %v1815 = vld [vmem:[#allocation5 + $0x40] sm:$0xff]
    %v1816 = vld [vmem:[#allocation5 + $0x48] sm:$0xff]
    %v1817 = vld [vmem:[#allocation5 + $0x50] sm:$0xff]
    %v1818 = vld [vmem:[#allocation5 + $0x58] sm:$0xff]
    %v1819 = vld [vmem:[#allocation5 + $0x60] sm:$0xff]
    %v1820 = vld [vmem:[#allocation5 + $0x68] sm:$0xff]
    %v1821 = vld [vmem:[#allocation5 + $0x70] sm:$0xff]
    %v1822 = vld [vmem:[#allocation5 + $0x78] sm:$0xff]
    %v1823 = vld [vmem:[#allocation5 + $0x80] sm:$0x1]
    %v1824 = vld [vmem:[#allocation5 + $0x88] sm:$0xff]
    %v1825 = vld [vmem:[#allocation5 + $0x90] sm:$0xff]
    %v1826 = vld [vmem:[#allocation5 + $0x98] sm:$0xff]
    %v1827 = vld [vmem:[#allocation5 + $0xa0] sm:$0xff]
    %v1828 = vld [vmem:[#allocation5 + $0xa8] sm:$0xff]
    %v1829 = vld [vmem:[#allocation5 + $0xb0] sm:$0xff]
    %v1830 = vld [vmem:[#allocation5 + $0xb8] sm:$0xff]
    %v1831 = vld [vmem:[#allocation5 + $0xc0] sm:$0xff]
    %v1832 = vld [vmem:[#allocation5 + $0xc8] sm:$0xff]
    %v1833 = vld [vmem:[#allocation5 + $0xd0] sm:$0xff]
    %v1834 = vld [vmem:[#allocation5 + $0xd8] sm:$0xff]
    %v1835 = vld [vmem:[#allocation5 + $0xe0] sm:$0xff]
    %v1836 = vld [vmem:[#allocation5 + $0xe8] sm:$0xff]
    %v1837 = vld [vmem:[#allocation5 + $0xf0] sm:$0xff]
    %v1838 = vld [vmem:[#allocation5 + $0xf8] sm:$0xff]
    %v1839 = vld [vmem:[#allocation5 + $0x100] sm:$0xff]
    %v1840 = vld [vmem:[#allocation5 + $0x108] sm:$0x1]
    %v1841 = vlaneseq
    %v1842 = vshrl.u32 %v1841, 7
    %v1843 = vsub.s32 0, %v1842
    %v1844 = vrot.slane %v1823, %v1843
    %1845 = vmatprep.subr.mxu0 0.0
    %1846 = vmatpush1.msra.mxu0 %v1807
    %1847 = vmatprep.subr.mxu0 0.0
    %1848 = vmatpush1.msra.mxu0 %v1808
    %1849 = vmatprep.subr.mxu0 0.0
    %1850 = vmatpush1.msra.mxu0 %v1809
    %1851 = vmatprep.subr.mxu0 0.0
    %1852 = vmatpush1.msra.mxu0 %v1810
    %1853 = vmatprep.subr.mxu0 0.0
    %1854 = vmatpush1.msra.mxu0 %v1811
    %1855 = vmatprep.subr.mxu0 0.0
    %1856 = vmatpush1.msra.mxu0 %v1812
    %1857 = vmatprep.subr.mxu0 0.0
    %1858 = vmatpush1.msra.mxu0 %v1813
    %1859 = vmatprep.subr.mxu0 0.0
    %1860 = vmatpush1.msra.mxu0 %v1814
    %1861 = vmatprep.subr.mxu0 0.0
    %1862 = vmatpush1.msra.mxu0 %v1815
    %1863 = vmatprep.subr.mxu0 0.0
    %1864 = vmatpush1.msra.mxu0 %v1816
    %1865 = vmatprep.subr.mxu0 0.0
    %1866 = vmatpush1.msra.mxu0 %v1817
    %1867 = vmatprep.subr.mxu0 0.0
    %1868 = vmatpush1.msra.mxu0 %v1818
    %1869 = vmatprep.subr.mxu0 0.0
    %1870 = vmatpush1.msra.mxu0 %v1819
    %1871 = vmatprep.subr.mxu0 0.0
    %1872 = vmatpush1.msra.mxu0 %v1820
    %1873 = vmatprep.subr.mxu0 0.0
    %1874 = vmatpush1.msra.mxu0 %v1821
    %1875 = vmatprep.subr.mxu0 0.0
    %1876 = vmatpush1.msra.mxu0 %v1822
    %1877 = vmatprep.subr.mxu0 0.0
    %1878 = vmatpush1.msra.mxu0 0.0
    %1879 = vmatprep.subr.mxu0 0.0
    %1880 = vmatpush1.msra.mxu0 0.0
    %1881 = vmatprep.subr.mxu0 0.0
    %1882 = vmatpush1.msra.mxu0 0.0
    %1883 = vmatprep.subr.mxu0 0.0
    %1884 = vmatpush1.msra.mxu0 0.0
    %1885 = vmatprep.subr.mxu0 0.0
    %1886 = vmatpush1.msra.mxu0 0.0
    %1887 = vmatprep.subr.mxu0 0.0
    %1888 = vmatpush1.msra.mxu0 0.0
    %1889 = vmatprep.subr.mxu0 0.0
    %1890 = vmatpush1.msra.mxu0 0.0
    %1891 = vmatprep.subr.mxu0 0.0
    %1892 = vmatpush1.msra.mxu0 0.0
    %1893 = vmatprep.subr.mxu0 0.0
    %1894 = vmatpush1.msra.mxu0 0.0
    %1895 = vmatprep.subr.mxu0 0.0
    %1896 = vmatpush1.msra.mxu0 0.0
    %1897 = vmatprep.subr.mxu0 0.0
    %1898 = vmatpush1.msra.mxu0 0.0
    %1899 = vmatprep.subr.mxu0 0.0
    %1900 = vmatpush1.msra.mxu0 0.0
    %1901 = vmatprep.subr.mxu0 0.0
    %1902 = vmatpush1.msra.mxu0 0.0
    %1903 = vmatprep.subr.mxu0 0.0
    %1904 = vmatpush1.msra.mxu0 0.0
    %1905 = vmatprep.subr.mxu0 0.0
    %1906 = vmatpush1.msra.mxu0 0.0
    %1907 = vmatprep.subr.mxu0 0.0
    %1908 = vmatpush1.msra.mxu0 0.0
    %1909 = vmatprep.mubr.f32.mxu0 0.0
    %1910 = vmatmul.mubr.f32.gmra.mrb[0].mxu0 %v1806
    %v1911 = vpop.f32.mrb[0].mxu0
    %v1912 = vadd.f32 %v1844, %v1911
    %v1913 = vpop.f32.mrb[0].mxu0
    %1914 = vdwg.mxu0
    %v1915 = vmax.f32 %v1912, 0.0
    %v1916 = vlaneseq
    %v1917 = vshrl.u32 %v1916, 7
    %v1918 = vsub.s32 0, %v1917
    %v1919 = vrot.slane %v1840, %v1918
    %1920 = vmatprep.subr.mxu0 0.0
    %1921 = vmatpush1.msra.mxu0 %v1824
    %1922 = vmatprep.subr.mxu0 0.0
    %1923 = vmatpush1.msra.mxu0 %v1825
    %1924 = vmatprep.subr.mxu0 0.0
    %1925 = vmatpush1.msra.mxu0 %v1826
    %1926 = vmatprep.subr.mxu0 0.0
    %1927 = vmatpush1.msra.mxu0 %v1827
    %1928 = vmatprep.subr.mxu0 0.0
    %1929 = vmatpush1.msra.mxu0 %v1828
    %1930 = vmatprep.subr.mxu0 0.0
    %1931 = vmatpush1.msra.mxu0 %v1829
    %1932 = vmatprep.subr.mxu0 0.0
    %1933 = vmatpush1.msra.mxu0 %v1830
    %1934 = vmatprep.subr.mxu0 0.0
    %1935 = vmatpush1.msra.mxu0 %v1831
    %1936 = vmatprep.subr.mxu0 0.0
    %1937 = vmatpush1.msra.mxu0 %v1832
    %1938 = vmatprep.subr.mxu0 0.0
    %1939 = vmatpush1.msra.mxu0 %v1833
    %1940 = vmatprep.subr.mxu0 0.0
    %1941 = vmatpush1.msra.mxu0 %v1834
    %1942 = vmatprep.subr.mxu0 0.0
    %1943 = vmatpush1.msra.mxu0 %v1835
    %1944 = vmatprep.subr.mxu0 0.0
    %1945 = vmatpush1.msra.mxu0 %v1836
    %1946 = vmatprep.subr.mxu0 0.0
    %1947 = vmatpush1.msra.mxu0 %v1837
    %1948 = vmatprep.subr.mxu0 0.0
    %1949 = vmatpush1.msra.mxu0 %v1838
    %1950 = vmatprep.subr.mxu0 0.0
    %1951 = vmatpush1.msra.mxu0 %v1839
    %1952 = vmatprep.subr.mxu0 0.0
    %1953 = vmatpush1.msra.mxu0 0.0
    %1954 = vmatprep.subr.mxu0 0.0
    %1955 = vmatpush1.msra.mxu0 0.0
    %1956 = vmatprep.subr.mxu0 0.0
    %1957 = vmatpush1.msra.mxu0 0.0
    %1958 = vmatprep.subr.mxu0 0.0
    %1959 = vmatpush1.msra.mxu0 0.0
    %1960 = vmatprep.subr.mxu0 0.0
    %1961 = vmatpush1.msra.mxu0 0.0
    %1962 = vmatprep.subr.mxu0 0.0
    %1963 = vmatpush1.msra.mxu0 0.0
    %1964 = vmatprep.subr.mxu0 0.0
    %1965 = vmatpush1.msra.mxu0 0.0
    %1966 = vmatprep.subr.mxu0 0.0
    %1967 = vmatpush1.msra.mxu0 0.0
    %1968 = vmatprep.subr.mxu0 0.0
    %1969 = vmatpush1.msra.mxu0 0.0
    %1970 = vmatprep.subr.mxu0 0.0
    %1971 = vmatpush1.msra.mxu0 0.0
    %1972 = vmatprep.subr.mxu0 0.0
    %1973 = vmatpush1.msra.mxu0 0.0
    %1974 = vmatprep.subr.mxu0 0.0
    %1975 = vmatpush1.msra.mxu0 0.0
    %1976 = vmatprep.subr.mxu0 0.0
    %1977 = vmatpush1.msra.mxu0 0.0
    %1978 = vmatprep.subr.mxu0 0.0
    %1979 = vmatpush1.msra.mxu0 0.0
    %1980 = vmatprep.subr.mxu0 0.0
    %1981 = vmatpush1.msra.mxu0 0.0
    %1982 = vmatprep.subr.mxu0 0.0
    %1983 = vmatpush1.msra.mxu0 0.0
    %1984 = vmatprep.mubr.f32.mxu0 0.0
    %1985 = vmatmul.mubr.f32.gmra.mrb[0].mxu0 %v1915
    %v1986 = vpop.f32.mrb[0].mxu0
    %v1987 = vadd.f32 %v1919, %v1986
    %v1988 = vpop.f32.mrb[0].mxu0
    %1989 = vdwg.mxu0
    %1990 = vst [vmem:[%s3] sm:$0xff] %v1987
    // Predicated region
    $region22: #{net_forward.1} parent=1 // pred_check
      _
    $region23: #{net_forward.1} parent=1 // pred_check_branch
      %1992 = sbr.rel (0) target = $region25
    $region24: #{net_forward.1} parent=1 // pred_region
      _
    $region25: #{net_forward.1} parent=1 // pred_fallthru
      _
    // Predicated region
    $region26: #{net_forward.1} parent=1 // pred_check
      _
    $region27: #{net_forward.1} parent=1 // pred_check_branch
      %1994 = sbr.rel (0) target = $region29
    $region28: #{net_forward.1} parent=1 // pred_region
      _
    $region29: #{net_forward.1} parent=1 // pred_fallthru
      _
    %1995 = vsyncpa [#allocation4], 1
    %1996 = vsyncpa [#allocation6], 1

</llo_original>
